<compile_context>
chip_gen: v7x
topology: tpu7x:2x2x1
jax: 0.10.0
libtpu: 0.0.40
codegen_flags: <defaults>
</compile_context>

<pallas_src>
import jax
import jax.numpy as jnp
from jax.experimental import pallas as pl
from jax.experimental.pallas import tpu as pltpu

# ----- hyper-parameters (small, consistent with the module's __init__) -----
SEQUENCE_LENGTH = 32          # sequence length (H of the NCHW input)
NUM_FILTERS     = 8           # conv output channels
LEN_FILTERS     = 5           # conv kernel height (odd -> "same" height w/ pad)
POOL_SIZE       = 8           # MaxPool2d kernel (pool_size, 1)
FULLY_CONNECTED = 32          # fc1 width
BATCH           = 2

assert SEQUENCE_LENGTH % POOL_SIZE == 0
POOL_OUT = SEQUENCE_LENGTH // POOL_SIZE
PAD      = LEN_FILTERS // 2
FC_IN    = POOL_OUT * NUM_FILTERS


# ============================ fused Pallas kernel ============================

def _fused_kernel(xp_ref, wc_ref, w1_ref, b1_ref, w2_ref, b2_ref, out_ref):
    """conv1 + MaxPool2d((POOL_SIZE,1)) + LeakyReLU + fc1 + LeakyReLU + fc2, whole batch.

    xp_ref : (N, SEQ + 2*PAD, 4)   zero-padded input (channel dim squeezed)
    wc_ref : (LEN_FILTERS, 4, F)   conv weight as (kh, kw, out_ch)
    w1_ref : (POOL_OUT, F, FC)     fc1 weight regrouped per pool position
    b1_ref : (1, FC)               fc1 bias
    w2_ref : (FC, 1)               fc2 weight
    b2_ref : (1,)  [SMEM]          fc2 bias (scalar)
    out_ref: (N, 1)
    """
    n_batch = xp_ref.shape[0]

    # Load every weight exactly once (full-extent VMEM blocks, hoisted out of loops).
    wk = [wc_ref[kh] for kh in range(LEN_FILTERS)]   # each (4, F)
    wp = [w1_ref[p] for p in range(POOL_OUT)]        # each (F, FC)
    b1 = b1_ref[...]                                 # (1, FC)
    w2 = w2_ref[...]                                 # (FC, 1)
    b2 = b2_ref[0]                                   # scalar from SMEM

    for n in range(n_batch):                         # static unroll, N is tiny
        # --- conv1 (kernel (LEN_FILTERS, 4), "same" along H) as accumulated matmuls
        #     over shifted slices of the padded input; f32 MXU accumulation. ---
        h = jnp.dot(xp_ref[n, pl.ds(0, SEQUENCE_LENGTH), :], wk[0],
                    preferred_element_type=jnp.float32)                # (SEQ, F)
        for kh in range(1, LEN_FILTERS):
            h = h + jnp.dot(xp_ref[n, pl.ds(kh, SEQUENCE_LENGTH), :], wk[kh],
                            preferred_element_type=jnp.float32)

        # --- maxpool + LeakyReLU(0.1) + fc1, fused per pool window so the pooled
        #     activation never leaves vregs (no intermediate stores at all). ---
        y = b1                                                          # (1, FC)
        for p in range(POOL_OUT):
            grp = h[p * POOL_SIZE:(p + 1) * POOL_SIZE, :]               # aligned slice
            m = jnp.max(grp, axis=0, keepdims=True)                     # (1, F)
            m = jnp.where(m > 0, m, 0.1 * m)                            # LeakyReLU(0.1)
            y = y + jnp.dot(m, wp[p], preferred_element_type=jnp.float32)
        y = jnp.where(y > 0, y, 0.1 * y)                                # LeakyReLU(0.1)

        # --- fc2 ---
        o = jnp.dot(y, w2, preferred_element_type=jnp.float32) + b2     # (1, 1)
        out_ref[pl.ds(n, 1), :] = o


def snp_discriminator_forward(x, params):
    """x: (N, 1, SEQUENCE_LENGTH, 4) float32 (NCHW, like PyTorch)."""
    w_conv_sn, w1_sn, b1, w2_sn, b2 = params
    n = x.shape[0]

    # Tiny wrapper-side prep (weights + zero pad along H only; width fully consumed).
    x_pad = jnp.pad(x[:, 0], ((0, 0), (PAD, PAD), (0, 0)))              # (N, SEQ+2P, 4)
    w_conv = jnp.transpose(w_conv_sn[:, 0], (1, 2, 0))                  # (KH, 4, F)
    # fc1 columns regrouped so w1r[p, f, :] multiplies pooled[p, f]; this matches
    # PyTorch's (channel, pool) .view(-1, fc_in) flatten order exactly.
    w1r = jnp.transpose(
        w1_sn.reshape(FULLY_CONNECTED, NUM_FILTERS, POOL_OUT), (2, 1, 0))  # (P, F, FC)

    return pl.pallas_call(
        _fused_kernel,
        out_shape=jax.ShapeDtypeStruct((n, 1), jnp.float32),
        in_specs=[
            pl.BlockSpec(memory_space=pltpu.MemorySpace.VMEM),   # x_pad
            pl.BlockSpec(memory_space=pltpu.MemorySpace.VMEM),   # conv weight
            pl.BlockSpec(memory_space=pltpu.MemorySpace.VMEM),   # fc1 weight
            pl.BlockSpec(memory_space=pltpu.MemorySpace.VMEM),   # fc1 bias
            pl.BlockSpec(memory_space=pltpu.MemorySpace.VMEM),   # fc2 weight
            pl.BlockSpec(memory_space=pltpu.MemorySpace.SMEM),   # fc2 bias (scalar)
        ],
        out_specs=pl.BlockSpec(memory_space=pltpu.MemorySpace.VMEM),
    )(x_pad, w_conv, w1r, b1.reshape(1, -1), w2_sn.T, b2)


# ============================ glue / parameters ============================

def spectral_norm(w2d, key, n_power_iterations=1, eps=1e-12):
    """SpectralNorm wrapper semantics: weight / sigma via power iteration (init-time)."""
    out_dim, _ = w2d.shape
    u = jax.random.normal(key, (out_dim,), dtype=jnp.float32)
    u = u / (jnp.linalg.norm(u) + eps)
    v = None
    for _ in range(n_power_iterations):
        v = w2d.T @ u
        v = v / (jnp.linalg.norm(v) + eps)
        u = w2d @ v
        u = u / (jnp.linalg.norm(u) + eps)
    sigma = u @ (w2d @ v)
    return w2d / sigma


def init_params(key):
    k = jax.random.split(key, 8)
    w_conv = 0.1 * jax.random.normal(k[0], (NUM_FILTERS, 1, LEN_FILTERS, 4), jnp.float32)
    w1 = 0.1 * jax.random.normal(k[1], (FULLY_CONNECTED, FC_IN), jnp.float32)
    b1 = 0.1 * jax.random.normal(k[2], (FULLY_CONNECTED,), jnp.float32)
    w2 = 0.1 * jax.random.normal(k[3], (1, FULLY_CONNECTED), jnp.float32)
    b2 = 0.1 * jax.random.normal(k[4], (1,), jnp.float32)

    # TODO(synk): PyTorch's SpectralNorm keeps a persistent `u` buffer across steps;
    # here a single deterministic power iteration is applied at init time only.
    w_conv_sn = spectral_norm(w_conv.reshape(NUM_FILTERS, -1), k[5]).reshape(w_conv.shape)
    w1_sn = spectral_norm(w1, k[6])
    w2_sn = spectral_norm(w2, k[7])
    return w_conv_sn, w1_sn, b1, w2_sn, b2


# ============================ reference (plain JAX) ============================

def reference_forward(x, params):
    w_conv_sn, w1_sn, b1, w2_sn, b2 = params
    n = x.shape[0]
    h = jax.lax.conv_general_dilated(
        x, w_conv_sn, window_strides=(1, 1), padding=((PAD, PAD), (0, 0)),
        dimension_numbers=("NCHW", "OIHW", "NCHW"))                   # (N, F, S, 1)
    h = jax.lax.reduce_window(h, -jnp.inf, jax.lax.max,
                              (1, 1, POOL_SIZE, 1), (1, 1, POOL_SIZE, 1), "VALID")
    h = jnp.where(h > 0, h, 0.1 * h)
    h = h.reshape(n, FC_IN)                                           # (F, POOL_OUT) order
    y = h @ w1_sn.T + b1
    y = jnp.where(y > 0, y, 0.1 * y)
    return y @ w2_sn.T + b2


# ============================ main ============================

if __name__ == "__main__":
    key = jax.random.PRNGKey(0)
    k_x, k_p = jax.random.split(key)
    x = jax.random.normal(k_x, (BATCH, 1, SEQUENCE_LENGTH, 4), jnp.float32)
    params = init_params(k_p)

    out = jax.jit(snp_discriminator_forward)(x, params)
    out = jax.block_until_ready(out)

    ref = reference_forward(x, params)
    assert out.shape == (BATCH, 1), out.shape
    assert jnp.allclose(out, ref, rtol=1e-3, atol=1e-3), (out, ref)
    print("KERNEL_OK")
</pallas_src>

<mosaic_0001>
module attributes {stable_mosaic.version = 11 : i64} {
  func.func @_fused_kernel(%arg0: memref<2x36x4xf32, #tpu.memory_space<vmem>>, %arg1: memref<5x4x8xf32, #tpu.memory_space<vmem>>, %arg2: memref<4x8x32xf32, #tpu.memory_space<vmem>>, %arg3: memref<1x32xf32, #tpu.memory_space<vmem>>, %arg4: memref<32x1xf32, #tpu.memory_space<vmem>>, %arg5: memref<1xf32, #tpu.memory_space<smem>>, %arg6: memref<2x1xf32, #tpu.memory_space<vmem>>) attributes {dimension_semantics = [], scalar_prefetch = 0 : i64, scratch_operands = 0 : i64, tpu.core_type = #tpu.core_type<tc>} {
    %c0 = arith.constant 0 : index
    %c0_0 = arith.constant 0 : index
    %c0_1 = arith.constant 0 : index
    %0 = vector.load %arg1[%c0, %c0_0, %c0_1] : memref<5x4x8xf32, #tpu.memory_space<vmem>>, vector<1x4x8xf32>
    %1 = vector.shape_cast %0 : vector<1x4x8xf32> to vector<4x8xf32>
    %c1 = arith.constant 1 : index
    %c0_2 = arith.constant 0 : index
    %c0_3 = arith.constant 0 : index
    %2 = vector.load %arg1[%c1, %c0_2, %c0_3] : memref<5x4x8xf32, #tpu.memory_space<vmem>>, vector<1x4x8xf32>
    %3 = vector.shape_cast %2 : vector<1x4x8xf32> to vector<4x8xf32>
    %c2 = arith.constant 2 : index
    %c0_4 = arith.constant 0 : index
    %c0_5 = arith.constant 0 : index
    %4 = vector.load %arg1[%c2, %c0_4, %c0_5] : memref<5x4x8xf32, #tpu.memory_space<vmem>>, vector<1x4x8xf32>
    %5 = vector.shape_cast %4 : vector<1x4x8xf32> to vector<4x8xf32>
    %c3 = arith.constant 3 : index
    %c0_6 = arith.constant 0 : index
    %c0_7 = arith.constant 0 : index
    %6 = vector.load %arg1[%c3, %c0_6, %c0_7] : memref<5x4x8xf32, #tpu.memory_space<vmem>>, vector<1x4x8xf32>
    %7 = vector.shape_cast %6 : vector<1x4x8xf32> to vector<4x8xf32>
    %c4 = arith.constant 4 : index
    %c0_8 = arith.constant 0 : index
    %c0_9 = arith.constant 0 : index
    %8 = vector.load %arg1[%c4, %c0_8, %c0_9] : memref<5x4x8xf32, #tpu.memory_space<vmem>>, vector<1x4x8xf32>
    %9 = vector.shape_cast %8 : vector<1x4x8xf32> to vector<4x8xf32>
    %c0_10 = arith.constant 0 : index
    %c0_11 = arith.constant 0 : index
    %c0_12 = arith.constant 0 : index
    %10 = vector.load %arg2[%c0_10, %c0_11, %c0_12] : memref<4x8x32xf32, #tpu.memory_space<vmem>>, vector<1x8x32xf32>
    %11 = vector.shape_cast %10 : vector<1x8x32xf32> to vector<8x32xf32>
    %c1_13 = arith.constant 1 : index
    %c0_14 = arith.constant 0 : index
    %c0_15 = arith.constant 0 : index
    %12 = vector.load %arg2[%c1_13, %c0_14, %c0_15] : memref<4x8x32xf32, #tpu.memory_space<vmem>>, vector<1x8x32xf32>
    %13 = vector.shape_cast %12 : vector<1x8x32xf32> to vector<8x32xf32>
    %c2_16 = arith.constant 2 : index
    %c0_17 = arith.constant 0 : index
    %c0_18 = arith.constant 0 : index
    %14 = vector.load %arg2[%c2_16, %c0_17, %c0_18] : memref<4x8x32xf32, #tpu.memory_space<vmem>>, vector<1x8x32xf32>
    %15 = vector.shape_cast %14 : vector<1x8x32xf32> to vector<8x32xf32>
    %c3_19 = arith.constant 3 : index
    %c0_20 = arith.constant 0 : index
    %c0_21 = arith.constant 0 : index
    %16 = vector.load %arg2[%c3_19, %c0_20, %c0_21] : memref<4x8x32xf32, #tpu.memory_space<vmem>>, vector<1x8x32xf32>
    %17 = vector.shape_cast %16 : vector<1x8x32xf32> to vector<8x32xf32>
    %c0_22 = arith.constant 0 : index
    %c0_23 = arith.constant 0 : index
    %18 = vector.load %arg3[%c0_22, %c0_23] : memref<1x32xf32, #tpu.memory_space<vmem>>, vector<1x32xf32>
    %c0_24 = arith.constant 0 : index
    %c0_25 = arith.constant 0 : index
    %19 = vector.load %arg4[%c0_24, %c0_25] : memref<32x1xf32, #tpu.memory_space<vmem>>, vector<32x1xf32>
    %c0_26 = arith.constant 0 : index
    %20 = memref.load %arg5[%c0_26] : memref<1xf32, #tpu.memory_space<smem>>
    %c0_27 = arith.constant 0 : index
    %c0_28 = arith.constant 0 : index
    %c0_29 = arith.constant 0 : index
    %21 = vector.load %arg0[%c0_27, %c0_28, %c0_29] : memref<2x36x4xf32, #tpu.memory_space<vmem>>, vector<1x32x4xf32>
    %22 = vector.shape_cast %21 : vector<1x32x4xf32> to vector<32x4xf32>
    %cst = arith.constant dense<0.000000e+00> : vector<32x8xf32>
    %23 = tpu.matmul %22, %1, %cst {dimension_numbers = #tpu.dot_dimension_numbers<[1], [0], [0], [1], [0, 0, 1, 1], [], []>} : vector<32x4xf32>, vector<4x8xf32>, vector<32x8xf32> -> vector<32x8xf32>
    %c0_30 = arith.constant 0 : index
    %c1_31 = arith.constant 1 : index
    %c0_32 = arith.constant 0 : index
    %24 = vector.load %arg0[%c0_30, %c1_31, %c0_32] : memref<2x36x4xf32, #tpu.memory_space<vmem>>, vector<1x32x4xf32>
    %25 = vector.shape_cast %24 : vector<1x32x4xf32> to vector<32x4xf32>
    %cst_33 = arith.constant dense<0.000000e+00> : vector<32x8xf32>
    %26 = tpu.matmul %25, %3, %cst_33 {dimension_numbers = #tpu.dot_dimension_numbers<[1], [0], [0], [1], [0, 0, 1, 1], [], []>} : vector<32x4xf32>, vector<4x8xf32>, vector<32x8xf32> -> vector<32x8xf32>
    %27 = arith.addf %23, %26 : vector<32x8xf32>
    %c0_34 = arith.constant 0 : index
    %c2_35 = arith.constant 2 : index
    %c0_36 = arith.constant 0 : index
    %28 = vector.load %arg0[%c0_34, %c2_35, %c0_36] : memref<2x36x4xf32, #tpu.memory_space<vmem>>, vector<1x32x4xf32>
    %29 = vector.shape_cast %28 : vector<1x32x4xf32> to vector<32x4xf32>
    %cst_37 = arith.constant dense<0.000000e+00> : vector<32x8xf32>
    %30 = tpu.matmul %29, %5, %cst_37 {dimension_numbers = #tpu.dot_dimension_numbers<[1], [0], [0], [1], [0, 0, 1, 1], [], []>} : vector<32x4xf32>, vector<4x8xf32>, vector<32x8xf32> -> vector<32x8xf32>
    %31 = arith.addf %27, %30 : vector<32x8xf32>
    %c0_38 = arith.constant 0 : index
    %c3_39 = arith.constant 3 : index
    %c0_40 = arith.constant 0 : index
    %32 = vector.load %arg0[%c0_38, %c3_39, %c0_40] : memref<2x36x4xf32, #tpu.memory_space<vmem>>, vector<1x32x4xf32>
    %33 = vector.shape_cast %32 : vector<1x32x4xf32> to vector<32x4xf32>
    %cst_41 = arith.constant dense<0.000000e+00> : vector<32x8xf32>
    %34 = tpu.matmul %33, %7, %cst_41 {dimension_numbers = #tpu.dot_dimension_numbers<[1], [0], [0], [1], [0, 0, 1, 1], [], []>} : vector<32x4xf32>, vector<4x8xf32>, vector<32x8xf32> -> vector<32x8xf32>
    %35 = arith.addf %31, %34 : vector<32x8xf32>
    %c0_42 = arith.constant 0 : index
    %c4_43 = arith.constant 4 : index
    %c0_44 = arith.constant 0 : index
    %36 = vector.load %arg0[%c0_42, %c4_43, %c0_44] : memref<2x36x4xf32, #tpu.memory_space<vmem>>, vector<1x32x4xf32>
    %37 = vector.shape_cast %36 : vector<1x32x4xf32> to vector<32x4xf32>
    %cst_45 = arith.constant dense<0.000000e+00> : vector<32x8xf32>
    %38 = tpu.matmul %37, %9, %cst_45 {dimension_numbers = #tpu.dot_dimension_numbers<[1], [0], [0], [1], [0, 0, 1, 1], [], []>} : vector<32x4xf32>, vector<4x8xf32>, vector<32x8xf32> -> vector<32x8xf32>
    %39 = arith.addf %35, %38 : vector<32x8xf32>
    %40 = vector.extract_strided_slice %39 {offsets = [0, 0], sizes = [8, 8], strides = [1, 1]} : vector<32x8xf32> to vector<8x8xf32>
    %cst_46 = arith.constant dense<0xFF800000> : vector<8xf32>
    %41 = vector.multi_reduction <maximumf>, %40, %cst_46 [0] : vector<8x8xf32> to vector<8xf32>
    %42 = vector.shape_cast %41 : vector<8xf32> to vector<1x8xf32>
    %cst_47 = arith.constant 0.000000e+00 : f32
    %43 = vector.broadcast %cst_47 : f32 to vector<1x8xf32>
    %44 = arith.cmpf ogt, %42, %43 : vector<1x8xf32>
    %cst_48 = arith.constant 1.000000e-01 : f32
    %45 = vector.broadcast %cst_48 : f32 to vector<1x8xf32>
    %46 = arith.mulf %45, %42 : vector<1x8xf32>
    %47 = arith.select %44, %42, %46 : vector<1x8xi1>, vector<1x8xf32>
    %cst_49 = arith.constant dense<0.000000e+00> : vector<1x32xf32>
    %48 = tpu.matmul %47, %11, %cst_49 {dimension_numbers = #tpu.dot_dimension_numbers<[1], [0], [0], [1], [0, 0, 1, 1], [], []>} : vector<1x8xf32>, vector<8x32xf32>, vector<1x32xf32> -> vector<1x32xf32>
    %49 = arith.addf %18, %48 : vector<1x32xf32>
    %50 = vector.extract_strided_slice %39 {offsets = [8, 0], sizes = [8, 8], strides = [1, 1]} : vector<32x8xf32> to vector<8x8xf32>
    %cst_50 = arith.constant dense<0xFF800000> : vector<8xf32>
    %51 = vector.multi_reduction <maximumf>, %50, %cst_50 [0] : vector<8x8xf32> to vector<8xf32>
    %52 = vector.shape_cast %51 : vector<8xf32> to vector<1x8xf32>
    %cst_51 = arith.constant 0.000000e+00 : f32
    %53 = vector.broadcast %cst_51 : f32 to vector<1x8xf32>
    %54 = arith.cmpf ogt, %52, %53 : vector<1x8xf32>
    %cst_52 = arith.constant 1.000000e-01 : f32
    %55 = vector.broadcast %cst_52 : f32 to vector<1x8xf32>
    %56 = arith.mulf %55, %52 : vector<1x8xf32>
    %57 = arith.select %54, %52, %56 : vector<1x8xi1>, vector<1x8xf32>
    %cst_53 = arith.constant dense<0.000000e+00> : vector<1x32xf32>
    %58 = tpu.matmul %57, %13, %cst_53 {dimension_numbers = #tpu.dot_dimension_numbers<[1], [0], [0], [1], [0, 0, 1, 1], [], []>} : vector<1x8xf32>, vector<8x32xf32>, vector<1x32xf32> -> vector<1x32xf32>
    %59 = arith.addf %49, %58 : vector<1x32xf32>
    %60 = vector.extract_strided_slice %39 {offsets = [16, 0], sizes = [8, 8], strides = [1, 1]} : vector<32x8xf32> to vector<8x8xf32>
    %cst_54 = arith.constant dense<0xFF800000> : vector<8xf32>
    %61 = vector.multi_reduction <maximumf>, %60, %cst_54 [0] : vector<8x8xf32> to vector<8xf32>
    %62 = vector.shape_cast %61 : vector<8xf32> to vector<1x8xf32>
    %cst_55 = arith.constant 0.000000e+00 : f32
    %63 = vector.broadcast %cst_55 : f32 to vector<1x8xf32>
    %64 = arith.cmpf ogt, %62, %63 : vector<1x8xf32>
    %cst_56 = arith.constant 1.000000e-01 : f32
    %65 = vector.broadcast %cst_56 : f32 to vector<1x8xf32>
    %66 = arith.mulf %65, %62 : vector<1x8xf32>
    %67 = arith.select %64, %62, %66 : vector<1x8xi1>, vector<1x8xf32>
    %cst_57 = arith.constant dense<0.000000e+00> : vector<1x32xf32>
    %68 = tpu.matmul %67, %15, %cst_57 {dimension_numbers = #tpu.dot_dimension_numbers<[1], [0], [0], [1], [0, 0, 1, 1], [], []>} : vector<1x8xf32>, vector<8x32xf32>, vector<1x32xf32> -> vector<1x32xf32>
    %69 = arith.addf %59, %68 : vector<1x32xf32>
    %70 = vector.extract_strided_slice %39 {offsets = [24, 0], sizes = [8, 8], strides = [1, 1]} : vector<32x8xf32> to vector<8x8xf32>
    %cst_58 = arith.constant dense<0xFF800000> : vector<8xf32>
    %71 = vector.multi_reduction <maximumf>, %70, %cst_58 [0] : vector<8x8xf32> to vector<8xf32>
    %72 = vector.shape_cast %71 : vector<8xf32> to vector<1x8xf32>
    %cst_59 = arith.constant 0.000000e+00 : f32
    %73 = vector.broadcast %cst_59 : f32 to vector<1x8xf32>
    %74 = arith.cmpf ogt, %72, %73 : vector<1x8xf32>
    %cst_60 = arith.constant 1.000000e-01 : f32
    %75 = vector.broadcast %cst_60 : f32 to vector<1x8xf32>
    %76 = arith.mulf %75, %72 : vector<1x8xf32>
    %77 = arith.select %74, %72, %76 : vector<1x8xi1>, vector<1x8xf32>
    %cst_61 = arith.constant dense<0.000000e+00> : vector<1x32xf32>
    %78 = tpu.matmul %77, %17, %cst_61 {dimension_numbers = #tpu.dot_dimension_numbers<[1], [0], [0], [1], [0, 0, 1, 1], [], []>} : vector<1x8xf32>, vector<8x32xf32>, vector<1x32xf32> -> vector<1x32xf32>
    %79 = arith.addf %69, %78 : vector<1x32xf32>
    %cst_62 = arith.constant 0.000000e+00 : f32
    %80 = vector.broadcast %cst_62 : f32 to vector<1x32xf32>
    %81 = arith.cmpf ogt, %79, %80 : vector<1x32xf32>
    %cst_63 = arith.constant 1.000000e-01 : f32
    %82 = vector.broadcast %cst_63 : f32 to vector<1x32xf32>
    %83 = arith.mulf %82, %79 : vector<1x32xf32>
    %84 = arith.select %81, %79, %83 : vector<1x32xi1>, vector<1x32xf32>
    %cst_64 = arith.constant dense<0.000000e+00> : vector<1x1xf32>
    %85 = tpu.matmul %84, %19, %cst_64 {dimension_numbers = #tpu.dot_dimension_numbers<[1], [0], [0], [1], [0, 0, 1, 1], [], []>} : vector<1x32xf32>, vector<32x1xf32>, vector<1x1xf32> -> vector<1x1xf32>
    %86 = vector.broadcast %20 : f32 to vector<1x1xf32>
    %87 = arith.addf %85, %86 : vector<1x1xf32>
    %c0_65 = arith.constant 0 : index
    %c0_66 = arith.constant 0 : index
    %88 = vector.load %arg6[%c0_65, %c0_66] : memref<2x1xf32, #tpu.memory_space<vmem>>, vector<1x1xf32>
    tpu.vector_store %arg6[%c0_65, %c0_66], %87 {strides = array<i32>} : memref<2x1xf32, #tpu.memory_space<vmem>>, vector<1x1xf32>,
    %c1_67 = arith.constant 1 : index
    %c0_68 = arith.constant 0 : index
    %c0_69 = arith.constant 0 : index
    %89 = vector.load %arg0[%c1_67, %c0_68, %c0_69] : memref<2x36x4xf32, #tpu.memory_space<vmem>>, vector<1x32x4xf32>
    %90 = vector.shape_cast %89 : vector<1x32x4xf32> to vector<32x4xf32>
    %cst_70 = arith.constant dense<0.000000e+00> : vector<32x8xf32>
    %91 = tpu.matmul %90, %1, %cst_70 {dimension_numbers = #tpu.dot_dimension_numbers<[1], [0], [0], [1], [0, 0, 1, 1], [], []>} : vector<32x4xf32>, vector<4x8xf32>, vector<32x8xf32> -> vector<32x8xf32>
    %c1_71 = arith.constant 1 : index
    %c1_72 = arith.constant 1 : index
    %c0_73 = arith.constant 0 : index
    %92 = vector.load %arg0[%c1_71, %c1_72, %c0_73] : memref<2x36x4xf32, #tpu.memory_space<vmem>>, vector<1x32x4xf32>
    %93 = vector.shape_cast %92 : vector<1x32x4xf32> to vector<32x4xf32>
    %cst_74 = arith.constant dense<0.000000e+00> : vector<32x8xf32>
    %94 = tpu.matmul %93, %3, %cst_74 {dimension_numbers = #tpu.dot_dimension_numbers<[1], [0], [0], [1], [0, 0, 1, 1], [], []>} : vector<32x4xf32>, vector<4x8xf32>, vector<32x8xf32> -> vector<32x8xf32>
    %95 = arith.addf %91, %94 : vector<32x8xf32>
    %c1_75 = arith.constant 1 : index
    %c2_76 = arith.constant 2 : index
    %c0_77 = arith.constant 0 : index
    %96 = vector.load %arg0[%c1_75, %c2_76, %c0_77] : memref<2x36x4xf32, #tpu.memory_space<vmem>>, vector<1x32x4xf32>
    %97 = vector.shape_cast %96 : vector<1x32x4xf32> to vector<32x4xf32>
    %cst_78 = arith.constant dense<0.000000e+00> : vector<32x8xf32>
    %98 = tpu.matmul %97, %5, %cst_78 {dimension_numbers = #tpu.dot_dimension_numbers<[1], [0], [0], [1], [0, 0, 1, 1], [], []>} : vector<32x4xf32>, vector<4x8xf32>, vector<32x8xf32> -> vector<32x8xf32>
    %99 = arith.addf %95, %98 : vector<32x8xf32>
    %c1_79 = arith.constant 1 : index
    %c3_80 = arith.constant 3 : index
    %c0_81 = arith.constant 0 : index
    %100 = vector.load %arg0[%c1_79, %c3_80, %c0_81] : memref<2x36x4xf32, #tpu.memory_space<vmem>>, vector<1x32x4xf32>
    %101 = vector.shape_cast %100 : vector<1x32x4xf32> to vector<32x4xf32>
    %cst_82 = arith.constant dense<0.000000e+00> : vector<32x8xf32>
    %102 = tpu.matmul %101, %7, %cst_82 {dimension_numbers = #tpu.dot_dimension_numbers<[1], [0], [0], [1], [0, 0, 1, 1], [], []>} : vector<32x4xf32>, vector<4x8xf32>, vector<32x8xf32> -> vector<32x8xf32>
    %103 = arith.addf %99, %102 : vector<32x8xf32>
    %c1_83 = arith.constant 1 : index
    %c4_84 = arith.constant 4 : index
    %c0_85 = arith.constant 0 : index
    %104 = vector.load %arg0[%c1_83, %c4_84, %c0_85] : memref<2x36x4xf32, #tpu.memory_space<vmem>>, vector<1x32x4xf32>
    %105 = vector.shape_cast %104 : vector<1x32x4xf32> to vector<32x4xf32>
    %cst_86 = arith.constant dense<0.000000e+00> : vector<32x8xf32>
    %106 = tpu.matmul %105, %9, %cst_86 {dimension_numbers = #tpu.dot_dimension_numbers<[1], [0], [0], [1], [0, 0, 1, 1], [], []>} : vector<32x4xf32>, vector<4x8xf32>, vector<32x8xf32> -> vector<32x8xf32>
    %107 = arith.addf %103, %106 : vector<32x8xf32>
    %108 = vector.extract_strided_slice %107 {offsets = [0, 0], sizes = [8, 8], strides = [1, 1]} : vector<32x8xf32> to vector<8x8xf32>
    %cst_87 = arith.constant dense<0xFF800000> : vector<8xf32>
    %109 = vector.multi_reduction <maximumf>, %108, %cst_87 [0] : vector<8x8xf32> to vector<8xf32>
    %110 = vector.shape_cast %109 : vector<8xf32> to vector<1x8xf32>
    %cst_88 = arith.constant 0.000000e+00 : f32
    %111 = vector.broadcast %cst_88 : f32 to vector<1x8xf32>
    %112 = arith.cmpf ogt, %110, %111 : vector<1x8xf32>
    %cst_89 = arith.constant 1.000000e-01 : f32
    %113 = vector.broadcast %cst_89 : f32 to vector<1x8xf32>
    %114 = arith.mulf %113, %110 : vector<1x8xf32>
    %115 = arith.select %112, %110, %114 : vector<1x8xi1>, vector<1x8xf32>
    %cst_90 = arith.constant dense<0.000000e+00> : vector<1x32xf32>
    %116 = tpu.matmul %115, %11, %cst_90 {dimension_numbers = #tpu.dot_dimension_numbers<[1], [0], [0], [1], [0, 0, 1, 1], [], []>} : vector<1x8xf32>, vector<8x32xf32>, vector<1x32xf32> -> vector<1x32xf32>
    %117 = arith.addf %18, %116 : vector<1x32xf32>
    %118 = vector.extract_strided_slice %107 {offsets = [8, 0], sizes = [8, 8], strides = [1, 1]} : vector<32x8xf32> to vector<8x8xf32>
    %cst_91 = arith.constant dense<0xFF800000> : vector<8xf32>
    %119 = vector.multi_reduction <maximumf>, %118, %cst_91 [0] : vector<8x8xf32> to vector<8xf32>
    %120 = vector.shape_cast %119 : vector<8xf32> to vector<1x8xf32>
    %cst_92 = arith.constant 0.000000e+00 : f32
    %121 = vector.broadcast %cst_92 : f32 to vector<1x8xf32>
    %122 = arith.cmpf ogt, %120, %121 : vector<1x8xf32>
    %cst_93 = arith.constant 1.000000e-01 : f32
    %123 = vector.broadcast %cst_93 : f32 to vector<1x8xf32>
    %124 = arith.mulf %123, %120 : vector<1x8xf32>
    %125 = arith.select %122, %120, %124 : vector<1x8xi1>, vector<1x8xf32>
    %cst_94 = arith.constant dense<0.000000e+00> : vector<1x32xf32>
    %126 = tpu.matmul %125, %13, %cst_94 {dimension_numbers = #tpu.dot_dimension_numbers<[1], [0], [0], [1], [0, 0, 1, 1], [], []>} : vector<1x8xf32>, vector<8x32xf32>, vector<1x32xf32> -> vector<1x32xf32>
    %127 = arith.addf %117, %126 : vector<1x32xf32>
    %128 = vector.extract_strided_slice %107 {offsets = [16, 0], sizes = [8, 8], strides = [1, 1]} : vector<32x8xf32> to vector<8x8xf32>
    %cst_95 = arith.constant dense<0xFF800000> : vector<8xf32>
    %129 = vector.multi_reduction <maximumf>, %128, %cst_95 [0] : vector<8x8xf32> to vector<8xf32>
    %130 = vector.shape_cast %129 : vector<8xf32> to vector<1x8xf32>
    %cst_96 = arith.constant 0.000000e+00 : f32
    %131 = vector.broadcast %cst_96 : f32 to vector<1x8xf32>
    %132 = arith.cmpf ogt, %130, %131 : vector<1x8xf32>
    %cst_97 = arith.constant 1.000000e-01 : f32
    %133 = vector.broadcast %cst_97 : f32 to vector<1x8xf32>
    %134 = arith.mulf %133, %130 : vector<1x8xf32>
    %135 = arith.select %132, %130, %134 : vector<1x8xi1>, vector<1x8xf32>
    %cst_98 = arith.constant dense<0.000000e+00> : vector<1x32xf32>
    %136 = tpu.matmul %135, %15, %cst_98 {dimension_numbers = #tpu.dot_dimension_numbers<[1], [0], [0], [1], [0, 0, 1, 1], [], []>} : vector<1x8xf32>, vector<8x32xf32>, vector<1x32xf32> -> vector<1x32xf32>
    %137 = arith.addf %127, %136 : vector<1x32xf32>
    %138 = vector.extract_strided_slice %107 {offsets = [24, 0], sizes = [8, 8], strides = [1, 1]} : vector<32x8xf32> to vector<8x8xf32>
    %cst_99 = arith.constant dense<0xFF800000> : vector<8xf32>
    %139 = vector.multi_reduction <maximumf>, %138, %cst_99 [0] : vector<8x8xf32> to vector<8xf32>
    %140 = vector.shape_cast %139 : vector<8xf32> to vector<1x8xf32>
    %cst_100 = arith.constant 0.000000e+00 : f32
    %141 = vector.broadcast %cst_100 : f32 to vector<1x8xf32>
    %142 = arith.cmpf ogt, %140, %141 : vector<1x8xf32>
    %cst_101 = arith.constant 1.000000e-01 : f32
    %143 = vector.broadcast %cst_101 : f32 to vector<1x8xf32>
    %144 = arith.mulf %143, %140 : vector<1x8xf32>
    %145 = arith.select %142, %140, %144 : vector<1x8xi1>, vector<1x8xf32>
    %cst_102 = arith.constant dense<0.000000e+00> : vector<1x32xf32>
    %146 = tpu.matmul %145, %17, %cst_102 {dimension_numbers = #tpu.dot_dimension_numbers<[1], [0], [0], [1], [0, 0, 1, 1], [], []>} : vector<1x8xf32>, vector<8x32xf32>, vector<1x32xf32> -> vector<1x32xf32>
    %147 = arith.addf %137, %146 : vector<1x32xf32>
    %cst_103 = arith.constant 0.000000e+00 : f32
    %148 = vector.broadcast %cst_103 : f32 to vector<1x32xf32>
    %149 = arith.cmpf ogt, %147, %148 : vector<1x32xf32>
    %cst_104 = arith.constant 1.000000e-01 : f32
    %150 = vector.broadcast %cst_104 : f32 to vector<1x32xf32>
    %151 = arith.mulf %150, %147 : vector<1x32xf32>
    %152 = arith.select %149, %147, %151 : vector<1x32xi1>, vector<1x32xf32>
    %cst_105 = arith.constant dense<0.000000e+00> : vector<1x1xf32>
    %153 = tpu.matmul %152, %19, %cst_105 {dimension_numbers = #tpu.dot_dimension_numbers<[1], [0], [0], [1], [0, 0, 1, 1], [], []>} : vector<1x32xf32>, vector<32x1xf32>, vector<1x1xf32> -> vector<1x1xf32>
    %154 = vector.broadcast %20 : f32 to vector<1x1xf32>
    %155 = arith.addf %153, %154 : vector<1x1xf32>
    %c1_106 = arith.constant 1 : index
    %c0_107 = arith.constant 0 : index
    %156 = vector.load %arg6[%c1_106, %c0_107] : memref<2x1xf32, #tpu.memory_space<vmem>>, vector<1x1xf32>
    tpu.vector_store %arg6[%c1_106, %c0_107], %155 {strides = array<i32>} : memref<2x1xf32, #tpu.memory_space<vmem>>, vector<1x1xf32>,
    return
  }
}

</mosaic_0001>

<llo_original>
// kernel: snp_discriminator_forward.1
$region0: #{snp_discriminator_forward.1}
  #allocation0 [shape = 'u32[]', space=smem, size = 0x4, offset = 0x4, fixed_abs, tag = 'smem constant byte address 0x4 - core index']
  #allocation1 [shape = 'u32[144,128]{1,0:T(1,128)}', space=vmem, size = 0x12000, scoped, tag = 'internal scratch']
  #allocation2 [shape = 'f32[1]{0:T(128)S(6)}', space=smem, size = 0x200, scoped, tag = 'scoped memory for snp_discriminator_forward.1']
  %s0 = inlined_call_operand.vmem [shape: f32[2,36,4], index: 0, kind: input, shape index: {}]
  %s1 = inlined_call_operand.vmem [shape: f32[5,4,8], index: 1, kind: input, shape index: {}]
  %s2 = inlined_call_operand.vmem [shape: f32[4,8,32], index: 2, kind: input, shape index: {}]
  %s3 = inlined_call_operand.vmem [shape: f32[1,32], index: 3, kind: input, shape index: {}]
  %s4 = inlined_call_operand.vmem [shape: f32[32,1], index: 4, kind: input, shape index: {}]
  %s5 = inlined_call_operand.<no memory space> [shape: f32[1], index: 5, kind: input, shape index: {}]
  %s6 = inlined_call_operand.vmem [shape: f32[2,1], index: 6, kind: output, shape index: {}]
  %s7 = sld [smem:[#allocation0]]
  $region34: #{snp_discriminator_forward.1} parent=0
    _
  %s9 = ssub.s32 1, %s7
  %s10 = scalar_select 0, %s9, %s7
  %11 = sst [smem:[#allocation2]] %s5
  // Predicated region
  $region2: #{snp_discriminator_forward.1} parent=0 // pred_check
    _
  $region3: #{snp_discriminator_forward.1} parent=0 // pred_check_branch
    %13 = sbr.rel (0) target = $region5
  $region4: #{snp_discriminator_forward.1} parent=0 // pred_region
    _
  $region5: #{snp_discriminator_forward.1} parent=0 // pred_fallthru
    _
  // Predicated region
  $region6: #{snp_discriminator_forward.1} parent=0 // pred_check
    _
  $region7: #{snp_discriminator_forward.1} parent=0 // pred_check_branch
    %15 = sbr.rel (0) target = $region9
  $region8: #{snp_discriminator_forward.1} parent=0 // pred_region
    _
  $region9: #{snp_discriminator_forward.1} parent=0 // pred_fallthru
    _
  // Predicated region
  $region10: #{snp_discriminator_forward.1} parent=0 // pred_check
    _
  $region11: #{snp_discriminator_forward.1} parent=0 // pred_check_branch
    %17 = sbr.rel (0) target = $region13
  $region12: #{snp_discriminator_forward.1} parent=0 // pred_region
    _
  $region13: #{snp_discriminator_forward.1} parent=0 // pred_fallthru
    _
  // Predicated region
  $region14: #{snp_discriminator_forward.1} parent=0 // pred_check
    _
  $region15: #{snp_discriminator_forward.1} parent=0 // pred_check_branch
    %19 = sbr.rel (0) target = $region17
  $region16: #{snp_discriminator_forward.1} parent=0 // pred_region
    _
  $region17: #{snp_discriminator_forward.1} parent=0 // pred_fallthru
    _
  // Predicated region
  $region18: #{snp_discriminator_forward.1} parent=0 // pred_check
    _
  $region19: #{snp_discriminator_forward.1} parent=0 // pred_check_branch
    %21 = sbr.rel (0) target = $region21
  $region20: #{snp_discriminator_forward.1} parent=0 // pred_region
    _
  $region21: #{snp_discriminator_forward.1} parent=0 // pred_fallthru
    _
  // Predicated region
  $region22: #{snp_discriminator_forward.1} parent=0 // pred_check
    _
  $region23: #{snp_discriminator_forward.1} parent=0 // pred_check_branch
    %23 = sbr.rel (0) target = $region25
  $region24: #{snp_discriminator_forward.1} parent=0 // pred_region
    _
  $region25: #{snp_discriminator_forward.1} parent=0 // pred_fallthru
    _
  %v24 = vld [vmem:[%s1] sm:$0xf]
  %s25 = scalar_lea.vmem %s1, 4
  %v26 = vld [vmem:[%s25] sm:$0xf]
  %s27 = scalar_lea.vmem %s1, 8
  %v28 = vld [vmem:[%s27] sm:$0xf]
  %s29 = scalar_lea.vmem %s1, 12
  %v30 = vld [vmem:[%s29] sm:$0xf]
  %s31 = scalar_lea.vmem %s1, 16
  %v32 = vld [vmem:[%s31] sm:$0xf]
  %v33 = vld [vmem:[%s2] sm:$0xff]
  %s34 = scalar_lea.vmem %s2, 8
  %v35 = vld [vmem:[%s34] sm:$0xff]
  %s36 = scalar_lea.vmem %s2, 16
  %v37 = vld [vmem:[%s36] sm:$0xff]
  %s38 = scalar_lea.vmem %s2, 24
  %v39 = vld [vmem:[%s38] sm:$0xff]
  %v40 = vld [vmem:[%s3] sm:$0x1]
  %v41 = vld [vmem:[%s4] sm:$0xff]
  %v42 = vld [vmem:[%s4 + $0x8] sm:$0xff]
  %v43 = vld [vmem:[%s4 + $0x10] sm:$0xff]
  %v44 = vld [vmem:[%s4 + $0x18] sm:$0xff]
  %s45 = sld [smem:[#allocation2]]
  %v46 = vld [vmem:[%s0] sm:$0xff]
  %v47 = vld [vmem:[%s0 + $0x8] sm:$0xff]
  %v48 = vld [vmem:[%s0 + $0x10] sm:$0xff]
  %v49 = vld [vmem:[%s0 + $0x18] sm:$0xff]
  %v50 = vld [vmem:[%s0 + $0x1] sm:$0xff]
  %v51 = vld [vmem:[%s0 + $0x9] sm:$0xff]
  %v52 = vld [vmem:[%s0 + $0x11] sm:$0xff]
  %v53 = vld [vmem:[%s0 + $0x19] sm:$0xff]
  %vm54 = vcmask 31744
  %v56 = vsel %vm54, %v50, 0
  %v59 = vsel %vm54, %v51, 0
  %v62 = vsel %vm54, %v52, 0
  %v65 = vsel %vm54, %v53, 0
  %vm67 = vcmask 1043456
  %v69 = vsel %vm67, %v26, 0
  %71 = vmatprep.subr.mxu0 0.0
  %72 = vmatpush1.msra.mxu0 %v69
  %73 = vmatprep.subr.mxu0 0.0
  %74 = vmatpush1.msra.mxu0 0.0
  %75 = vmatprep.subr.mxu0 0.0
  %76 = vmatpush1.msra.mxu0 0.0
  %77 = vmatprep.subr.mxu0 0.0
  %78 = vmatpush1.msra.mxu0 0.0
  %79 = vmatprep.subr.mxu0 0.0
  %80 = vmatpush1.msra.mxu0 0.0
  %81 = vmatprep.subr.mxu0 0.0
  %82 = vmatpush1.msra.mxu0 0.0
  %83 = vmatprep.subr.mxu0 0.0
  %84 = vmatpush1.msra.mxu0 0.0
  %85 = vmatprep.subr.mxu0 0.0
  %86 = vmatpush1.msra.mxu0 0.0
  %87 = vmatprep.subr.mxu0 0.0
  %88 = vmatpush1.msra.mxu0 0.0
  %89 = vmatprep.subr.mxu0 0.0
  %90 = vmatpush1.msra.mxu0 0.0
  %91 = vmatprep.subr.mxu0 0.0
  %92 = vmatpush1.msra.mxu0 0.0
  %93 = vmatprep.subr.mxu0 0.0
  %94 = vmatpush1.msra.mxu0 0.0
  %95 = vmatprep.subr.mxu0 0.0
  %96 = vmatpush1.msra.mxu0 0.0
  %97 = vmatprep.subr.mxu0 0.0
  %98 = vmatpush1.msra.mxu0 0.0
  %99 = vmatprep.subr.mxu0 0.0
  %100 = vmatpush1.msra.mxu0 0.0
  %101 = vmatprep.subr.mxu0 0.0
  %102 = vmatpush1.msra.mxu0 0.0
  %103 = vmatprep.subr.mxu0 0.0
  %104 = vmatpush1.msra.mxu0 0.0
  %105 = vmatprep.subr.mxu0 0.0
  %106 = vmatpush1.msra.mxu0 0.0
  %107 = vmatprep.subr.mxu0 0.0
  %108 = vmatpush1.msra.mxu0 0.0
  %109 = vmatprep.subr.mxu0 0.0
  %110 = vmatpush1.msra.mxu0 0.0
  %111 = vmatprep.subr.mxu0 0.0
  %112 = vmatpush1.msra.mxu0 0.0
  %113 = vmatprep.subr.mxu0 0.0
  %114 = vmatpush1.msra.mxu0 0.0
  %115 = vmatprep.subr.mxu0 0.0
  %116 = vmatpush1.msra.mxu0 0.0
  %117 = vmatprep.subr.mxu0 0.0
  %118 = vmatpush1.msra.mxu0 0.0
  %119 = vmatprep.subr.mxu0 0.0
  %120 = vmatpush1.msra.mxu0 0.0
  %121 = vmatprep.subr.mxu0 0.0
  %122 = vmatpush1.msra.mxu0 0.0
  %123 = vmatprep.subr.mxu0 0.0
  %124 = vmatpush1.msra.mxu0 0.0
  %125 = vmatprep.subr.mxu0 0.0
  %126 = vmatpush1.msra.mxu0 0.0
  %127 = vmatprep.subr.mxu0 0.0
  %128 = vmatpush1.msra.mxu0 0.0
  %129 = vmatprep.subr.mxu0 0.0
  %130 = vmatpush1.msra.mxu0 0.0
  %131 = vmatprep.subr.mxu0 0.0
  %132 = vmatpush1.msra.mxu0 0.0
  %133 = vmatprep.subr.mxu0 0.0
  %134 = vmatpush1.msra.mxu0 0.0
  %135 = vmatprep.mubr.f32.mxu0 0.0
  %136 = vmatmul.mubr.f32.gmra.mrb[0].mxu0 %v56
  %v137 = vpop.f32.mrb[0].mxu0
  %v138 = vadd.f32 0.0, %v137
  %v139 = vpop.f32.mrb[0].mxu0
  %140 = vmatprep.mubr.f32.mxu0 0.0
  %141 = vmatmul.mubr.f32.gmra.mrb[0].mxu0 %v59
  %v142 = vpop.f32.mrb[0].mxu0
  %v143 = vadd.f32 0.0, %v142
  %v144 = vpop.f32.mrb[0].mxu0
  %145 = vmatprep.mubr.f32.mxu0 0.0
  %146 = vmatmul.mubr.f32.gmra.mrb[0].mxu0 %v62
  %v147 = vpop.f32.mrb[0].mxu0
  %v148 = vadd.f32 0.0, %v147
  %v149 = vpop.f32.mrb[0].mxu0
  %150 = vmatprep.mubr.f32.mxu0 0.0
  %151 = vmatmul.mubr.f32.gmra.mrb[0].mxu0 %v65
  %v152 = vpop.f32.mrb[0].mxu0
  %v153 = vadd.f32 0.0, %v152
  %v154 = vpop.f32.mrb[0].mxu0
  %155 = vdwg.mxu0
  %v157 = vsel %vm54, %v46, 0
  %v160 = vsel %vm54, %v47, 0
  %v163 = vsel %vm54, %v48, 0
  %v166 = vsel %vm54, %v49, 0
  %v169 = vsel %vm67, %v24, 0
  %171 = vmatprep.subr.mxu0 0.0
  %172 = vmatpush1.msra.mxu0 %v169
  %173 = vmatprep.subr.mxu0 0.0
  %174 = vmatpush1.msra.mxu0 0.0
  %175 = vmatprep.subr.mxu0 0.0
  %176 = vmatpush1.msra.mxu0 0.0
  %177 = vmatprep.subr.mxu0 0.0
  %178 = vmatpush1.msra.mxu0 0.0
  %179 = vmatprep.subr.mxu0 0.0
  %180 = vmatpush1.msra.mxu0 0.0
  %181 = vmatprep.subr.mxu0 0.0
  %182 = vmatpush1.msra.mxu0 0.0
  %183 = vmatprep.subr.mxu0 0.0
  %184 = vmatpush1.msra.mxu0 0.0
  %185 = vmatprep.subr.mxu0 0.0
  %186 = vmatpush1.msra.mxu0 0.0
  %187 = vmatprep.subr.mxu0 0.0
  %188 = vmatpush1.msra.mxu0 0.0
  %189 = vmatprep.subr.mxu0 0.0
  %190 = vmatpush1.msra.mxu0 0.0
  %191 = vmatprep.subr.mxu0 0.0
  %192 = vmatpush1.msra.mxu0 0.0
  %193 = vmatprep.subr.mxu0 0.0
  %194 = vmatpush1.msra.mxu0 0.0
  %195 = vmatprep.subr.mxu0 0.0
  %196 = vmatpush1.msra.mxu0 0.0
  %197 = vmatprep.subr.mxu0 0.0
  %198 = vmatpush1.msra.mxu0 0.0
  %199 = vmatprep.subr.mxu0 0.0
  %200 = vmatpush1.msra.mxu0 0.0
  %201 = vmatprep.subr.mxu0 0.0
  %202 = vmatpush1.msra.mxu0 0.0
  %203 = vmatprep.subr.mxu0 0.0
  %204 = vmatpush1.msra.mxu0 0.0
  %205 = vmatprep.subr.mxu0 0.0
  %206 = vmatpush1.msra.mxu0 0.0
  %207 = vmatprep.subr.mxu0 0.0
  %208 = vmatpush1.msra.mxu0 0.0
  %209 = vmatprep.subr.mxu0 0.0
  %210 = vmatpush1.msra.mxu0 0.0
  %211 = vmatprep.subr.mxu0 0.0
  %212 = vmatpush1.msra.mxu0 0.0
  %213 = vmatprep.subr.mxu0 0.0
  %214 = vmatpush1.msra.mxu0 0.0
  %215 = vmatprep.subr.mxu0 0.0
  %216 = vmatpush1.msra.mxu0 0.0
  %217 = vmatprep.subr.mxu0 0.0
  %218 = vmatpush1.msra.mxu0 0.0
  %219 = vmatprep.subr.mxu0 0.0
  %220 = vmatpush1.msra.mxu0 0.0
  %221 = vmatprep.subr.mxu0 0.0
  %222 = vmatpush1.msra.mxu0 0.0
  %223 = vmatprep.subr.mxu0 0.0
  %224 = vmatpush1.msra.mxu0 0.0
  %225 = vmatprep.subr.mxu0 0.0
  %226 = vmatpush1.msra.mxu0 0.0
  %227 = vmatprep.subr.mxu0 0.0
  %228 = vmatpush1.msra.mxu0 0.0
  %229 = vmatprep.subr.mxu0 0.0
  %230 = vmatpush1.msra.mxu0 0.0
  %231 = vmatprep.subr.mxu0 0.0
  %232 = vmatpush1.msra.mxu0 0.0
  %233 = vmatprep.subr.mxu0 0.0
  %234 = vmatpush1.msra.mxu0 0.0
  %235 = vmatprep.mubr.f32.mxu0 0.0
  %236 = vmatmul.mubr.f32.gmra.mrb[0].mxu0 %v157
  %v237 = vpop.f32.mrb[0].mxu0
  %v238 = vadd.f32 %v138, %v237
  %v239 = vpop.f32.mrb[0].mxu0
  %240 = vmatprep.mubr.f32.mxu0 0.0
  %241 = vmatmul.mubr.f32.gmra.mrb[0].mxu0 %v160
  %v242 = vpop.f32.mrb[0].mxu0
  %v243 = vadd.f32 %v143, %v242
  %v244 = vpop.f32.mrb[0].mxu0
  %245 = vmatprep.mubr.f32.mxu0 0.0
  %246 = vmatmul.mubr.f32.gmra.mrb[0].mxu0 %v163
  %v247 = vpop.f32.mrb[0].mxu0
  %v248 = vadd.f32 %v148, %v247
  %v249 = vpop.f32.mrb[0].mxu0
  %250 = vmatprep.mubr.f32.mxu0 0.0
  %251 = vmatmul.mubr.f32.gmra.mrb[0].mxu0 %v166
  %v252 = vpop.f32.mrb[0].mxu0
  %v253 = vadd.f32 %v153, %v252
  %v254 = vpop.f32.mrb[0].mxu0
  %255 = vdwg.mxu0
  %v256 = vld [vmem:[%s0 + $0x2] sm:$0xff]
  %v257 = vld [vmem:[%s0 + $0xa] sm:$0xff]
  %v258 = vld [vmem:[%s0 + $0x12] sm:$0xff]
  %v259 = vld [vmem:[%s0 + $0x1a] sm:$0xff]
  %v261 = vsel %vm54, %v256, 0
  %v264 = vsel %vm54, %v257, 0
  %v267 = vsel %vm54, %v258, 0
  %v270 = vsel %vm54, %v259, 0
  %v273 = vsel %vm67, %v28, 0
  %275 = vmatprep.subr.mxu0 0.0
  %276 = vmatpush1.msra.mxu0 %v273
  %277 = vmatprep.subr.mxu0 0.0
  %278 = vmatpush1.msra.mxu0 0.0
  %279 = vmatprep.subr.mxu0 0.0
  %280 = vmatpush1.msra.mxu0 0.0
  %281 = vmatprep.subr.mxu0 0.0
  %282 = vmatpush1.msra.mxu0 0.0
  %283 = vmatprep.subr.mxu0 0.0
  %284 = vmatpush1.msra.mxu0 0.0
  %285 = vmatprep.subr.mxu0 0.0
  %286 = vmatpush1.msra.mxu0 0.0
  %287 = vmatprep.subr.mxu0 0.0
  %288 = vmatpush1.msra.mxu0 0.0
  %289 = vmatprep.subr.mxu0 0.0
  %290 = vmatpush1.msra.mxu0 0.0
  %291 = vmatprep.subr.mxu0 0.0
  %292 = vmatpush1.msra.mxu0 0.0
  %293 = vmatprep.subr.mxu0 0.0
  %294 = vmatpush1.msra.mxu0 0.0
  %295 = vmatprep.subr.mxu0 0.0
  %296 = vmatpush1.msra.mxu0 0.0
  %297 = vmatprep.subr.mxu0 0.0
  %298 = vmatpush1.msra.mxu0 0.0
  %299 = vmatprep.subr.mxu0 0.0
  %300 = vmatpush1.msra.mxu0 0.0
  %301 = vmatprep.subr.mxu0 0.0
  %302 = vmatpush1.msra.mxu0 0.0
  %303 = vmatprep.subr.mxu0 0.0
  %304 = vmatpush1.msra.mxu0 0.0
  %305 = vmatprep.subr.mxu0 0.0
  %306 = vmatpush1.msra.mxu0 0.0
  %307 = vmatprep.subr.mxu0 0.0
  %308 = vmatpush1.msra.mxu0 0.0
  %309 = vmatprep.subr.mxu0 0.0
  %310 = vmatpush1.msra.mxu0 0.0
  %311 = vmatprep.subr.mxu0 0.0
  %312 = vmatpush1.msra.mxu0 0.0
  %313 = vmatprep.subr.mxu0 0.0
  %314 = vmatpush1.msra.mxu0 0.0
  %315 = vmatprep.subr.mxu0 0.0
  %316 = vmatpush1.msra.mxu0 0.0
  %317 = vmatprep.subr.mxu0 0.0
  %318 = vmatpush1.msra.mxu0 0.0
  %319 = vmatprep.subr.mxu0 0.0
  %320 = vmatpush1.msra.mxu0 0.0
  %321 = vmatprep.subr.mxu0 0.0
  %322 = vmatpush1.msra.mxu0 0.0
  %323 = vmatprep.subr.mxu0 0.0
  %324 = vmatpush1.msra.mxu0 0.0
  %325 = vmatprep.subr.mxu0 0.0
  %326 = vmatpush1.msra.mxu0 0.0
  %327 = vmatprep.subr.mxu0 0.0
  %328 = vmatpush1.msra.mxu0 0.0
  %329 = vmatprep.subr.mxu0 0.0
  %330 = vmatpush1.msra.mxu0 0.0
  %331 = vmatprep.subr.mxu0 0.0
  %332 = vmatpush1.msra.mxu0 0.0
  %333 = vmatprep.subr.mxu0 0.0
  %334 = vmatpush1.msra.mxu0 0.0
  %335 = vmatprep.subr.mxu0 0.0
  %336 = vmatpush1.msra.mxu0 0.0
  %337 = vmatprep.subr.mxu0 0.0
  %338 = vmatpush1.msra.mxu0 0.0
  %339 = vmatprep.mubr.f32.mxu0 0.0
  %340 = vmatmul.mubr.f32.gmra.mrb[0].mxu0 %v261
  %v341 = vpop.f32.mrb[0].mxu0
  %v342 = vadd.f32 0.0, %v341
  %v343 = vpop.f32.mrb[0].mxu0
  %344 = vmatprep.mubr.f32.mxu0 0.0
  %345 = vmatmul.mubr.f32.gmra.mrb[0].mxu0 %v264
  %v346 = vpop.f32.mrb[0].mxu0
  %v347 = vadd.f32 0.0, %v346
  %v348 = vpop.f32.mrb[0].mxu0
  %349 = vmatprep.mubr.f32.mxu0 0.0
  %350 = vmatmul.mubr.f32.gmra.mrb[0].mxu0 %v267
  %v351 = vpop.f32.mrb[0].mxu0
  %v352 = vadd.f32 0.0, %v351
  %v353 = vpop.f32.mrb[0].mxu0
  %354 = vmatprep.mubr.f32.mxu0 0.0
  %355 = vmatmul.mubr.f32.gmra.mrb[0].mxu0 %v270
  %v356 = vpop.f32.mrb[0].mxu0
  %v357 = vadd.f32 0.0, %v356
  %v358 = vpop.f32.mrb[0].mxu0
  %359 = vdwg.mxu0
  %v360 = vadd.f32 %v238, %v342
  %v361 = vadd.f32 %v243, %v347
  %v362 = vadd.f32 %v248, %v352
  %v363 = vadd.f32 %v253, %v357
  %v364 = vld [vmem:[%s0 + $0x3] sm:$0xff]
  %v365 = vld [vmem:[%s0 + $0xb] sm:$0xff]
  %v366 = vld [vmem:[%s0 + $0x13] sm:$0xff]
  %v367 = vld [vmem:[%s0 + $0x1b] sm:$0xff]
  %v369 = vsel %vm54, %v364, 0
  %v372 = vsel %vm54, %v365, 0
  %v375 = vsel %vm54, %v366, 0
  %v378 = vsel %vm54, %v367, 0
  %v381 = vsel %vm67, %v30, 0
  %383 = vmatprep.subr.mxu0 0.0
  %384 = vmatpush1.msra.mxu0 %v381
  %385 = vmatprep.subr.mxu0 0.0
  %386 = vmatpush1.msra.mxu0 0.0
  %387 = vmatprep.subr.mxu0 0.0
  %388 = vmatpush1.msra.mxu0 0.0
  %389 = vmatprep.subr.mxu0 0.0
  %390 = vmatpush1.msra.mxu0 0.0
  %391 = vmatprep.subr.mxu0 0.0
  %392 = vmatpush1.msra.mxu0 0.0
  %393 = vmatprep.subr.mxu0 0.0
  %394 = vmatpush1.msra.mxu0 0.0
  %395 = vmatprep.subr.mxu0 0.0
  %396 = vmatpush1.msra.mxu0 0.0
  %397 = vmatprep.subr.mxu0 0.0
  %398 = vmatpush1.msra.mxu0 0.0
  %399 = vmatprep.subr.mxu0 0.0
  %400 = vmatpush1.msra.mxu0 0.0
  %401 = vmatprep.subr.mxu0 0.0
  %402 = vmatpush1.msra.mxu0 0.0
  %403 = vmatprep.subr.mxu0 0.0
  %404 = vmatpush1.msra.mxu0 0.0
  %405 = vmatprep.subr.mxu0 0.0
  %406 = vmatpush1.msra.mxu0 0.0
  %407 = vmatprep.subr.mxu0 0.0
  %408 = vmatpush1.msra.mxu0 0.0
  %409 = vmatprep.subr.mxu0 0.0
  %410 = vmatpush1.msra.mxu0 0.0
  %411 = vmatprep.subr.mxu0 0.0
  %412 = vmatpush1.msra.mxu0 0.0
  %413 = vmatprep.subr.mxu0 0.0
  %414 = vmatpush1.msra.mxu0 0.0
  %415 = vmatprep.subr.mxu0 0.0
  %416 = vmatpush1.msra.mxu0 0.0
  %417 = vmatprep.subr.mxu0 0.0
  %418 = vmatpush1.msra.mxu0 0.0
  %419 = vmatprep.subr.mxu0 0.0
  %420 = vmatpush1.msra.mxu0 0.0
  %421 = vmatprep.subr.mxu0 0.0
  %422 = vmatpush1.msra.mxu0 0.0
  %423 = vmatprep.subr.mxu0 0.0
  %424 = vmatpush1.msra.mxu0 0.0
  %425 = vmatprep.subr.mxu0 0.0
  %426 = vmatpush1.msra.mxu0 0.0
  %427 = vmatprep.subr.mxu0 0.0
  %428 = vmatpush1.msra.mxu0 0.0
  %429 = vmatprep.subr.mxu0 0.0
  %430 = vmatpush1.msra.mxu0 0.0
  %431 = vmatprep.subr.mxu0 0.0
  %432 = vmatpush1.msra.mxu0 0.0
  %433 = vmatprep.subr.mxu0 0.0
  %434 = vmatpush1.msra.mxu0 0.0
  %435 = vmatprep.subr.mxu0 0.0
  %436 = vmatpush1.msra.mxu0 0.0
  %437 = vmatprep.subr.mxu0 0.0
  %438 = vmatpush1.msra.mxu0 0.0
  %439 = vmatprep.subr.mxu0 0.0
  %440 = vmatpush1.msra.mxu0 0.0
  %441 = vmatprep.subr.mxu0 0.0
  %442 = vmatpush1.msra.mxu0 0.0
  %443 = vmatprep.subr.mxu0 0.0
  %444 = vmatpush1.msra.mxu0 0.0
  %445 = vmatprep.subr.mxu0 0.0
  %446 = vmatpush1.msra.mxu0 0.0
  %447 = vmatprep.mubr.f32.mxu0 0.0
  %448 = vmatmul.mubr.f32.gmra.mrb[0].mxu0 %v369
  %v449 = vpop.f32.mrb[0].mxu0
  %v450 = vadd.f32 0.0, %v449
  %v451 = vpop.f32.mrb[0].mxu0
  %452 = vmatprep.mubr.f32.mxu0 0.0
  %453 = vmatmul.mubr.f32.gmra.mrb[0].mxu0 %v372
  %v454 = vpop.f32.mrb[0].mxu0
  %v455 = vadd.f32 0.0, %v454
  %v456 = vpop.f32.mrb[0].mxu0
  %457 = vmatprep.mubr.f32.mxu0 0.0
  %458 = vmatmul.mubr.f32.gmra.mrb[0].mxu0 %v375
  %v459 = vpop.f32.mrb[0].mxu0
  %v460 = vadd.f32 0.0, %v459
  %v461 = vpop.f32.mrb[0].mxu0
  %462 = vmatprep.mubr.f32.mxu0 0.0
  %463 = vmatmul.mubr.f32.gmra.mrb[0].mxu0 %v378
  %v464 = vpop.f32.mrb[0].mxu0
  %v465 = vadd.f32 0.0, %v464
  %v466 = vpop.f32.mrb[0].mxu0
  %467 = vdwg.mxu0
  %v468 = vadd.f32 %v360, %v450
  %v469 = vadd.f32 %v361, %v455
  %v470 = vadd.f32 %v362, %v460
  %v471 = vadd.f32 %v363, %v465
  %v472 = vld [vmem:[%s0 + $0x4] sm:$0xff]
  %v473 = vld [vmem:[%s0 + $0xc] sm:$0xff]
  %v474 = vld [vmem:[%s0 + $0x14] sm:$0xff]
  %v475 = vld [vmem:[%s0 + $0x1c] sm:$0xff]
  %v477 = vsel %vm54, %v472, 0
  %v480 = vsel %vm54, %v473, 0
  %v483 = vsel %vm54, %v474, 0
  %v486 = vsel %vm54, %v475, 0
  %v489 = vsel %vm67, %v32, 0
  %491 = vmatprep.subr.mxu0 0.0
  %492 = vmatpush1.msra.mxu0 %v489
  %493 = vmatprep.subr.mxu0 0.0
  %494 = vmatpush1.msra.mxu0 0.0
  %495 = vmatprep.subr.mxu0 0.0
  %496 = vmatpush1.msra.mxu0 0.0
  %497 = vmatprep.subr.mxu0 0.0
  %498 = vmatpush1.msra.mxu0 0.0
  %499 = vmatprep.subr.mxu0 0.0
  %500 = vmatpush1.msra.mxu0 0.0
  %501 = vmatprep.subr.mxu0 0.0
  %502 = vmatpush1.msra.mxu0 0.0
  %503 = vmatprep.subr.mxu0 0.0
  %504 = vmatpush1.msra.mxu0 0.0
  %505 = vmatprep.subr.mxu0 0.0
  %506 = vmatpush1.msra.mxu0 0.0
  %507 = vmatprep.subr.mxu0 0.0
  %508 = vmatpush1.msra.mxu0 0.0
  %509 = vmatprep.subr.mxu0 0.0
  %510 = vmatpush1.msra.mxu0 0.0
  %511 = vmatprep.subr.mxu0 0.0
  %512 = vmatpush1.msra.mxu0 0.0
  %513 = vmatprep.subr.mxu0 0.0
  %514 = vmatpush1.msra.mxu0 0.0
  %515 = vmatprep.subr.mxu0 0.0
  %516 = vmatpush1.msra.mxu0 0.0
  %517 = vmatprep.subr.mxu0 0.0
  %518 = vmatpush1.msra.mxu0 0.0
  %519 = vmatprep.subr.mxu0 0.0
  %520 = vmatpush1.msra.mxu0 0.0
  %521 = vmatprep.subr.mxu0 0.0
  %522 = vmatpush1.msra.mxu0 0.0
  %523 = vmatprep.subr.mxu0 0.0
  %524 = vmatpush1.msra.mxu0 0.0
  %525 = vmatprep.subr.mxu0 0.0
  %526 = vmatpush1.msra.mxu0 0.0
  %527 = vmatprep.subr.mxu0 0.0
  %528 = vmatpush1.msra.mxu0 0.0
  %529 = vmatprep.subr.mxu0 0.0
  %530 = vmatpush1.msra.mxu0 0.0
  %531 = vmatprep.subr.mxu0 0.0
  %532 = vmatpush1.msra.mxu0 0.0
  %533 = vmatprep.subr.mxu0 0.0
  %534 = vmatpush1.msra.mxu0 0.0
  %535 = vmatprep.subr.mxu0 0.0
  %536 = vmatpush1.msra.mxu0 0.0
  %537 = vmatprep.subr.mxu0 0.0
  %538 = vmatpush1.msra.mxu0 0.0
  %539 = vmatprep.subr.mxu0 0.0
  %540 = vmatpush1.msra.mxu0 0.0
  %541 = vmatprep.subr.mxu0 0.0
  %542 = vmatpush1.msra.mxu0 0.0
  %543 = vmatprep.subr.mxu0 0.0
  %544 = vmatpush1.msra.mxu0 0.0
  %545 = vmatprep.subr.mxu0 0.0
  %546 = vmatpush1.msra.mxu0 0.0
  %547 = vmatprep.subr.mxu0 0.0
  %548 = vmatpush1.msra.mxu0 0.0
  %549 = vmatprep.subr.mxu0 0.0
  %550 = vmatpush1.msra.mxu0 0.0
  %551 = vmatprep.subr.mxu0 0.0
  %552 = vmatpush1.msra.mxu0 0.0
  %553 = vmatprep.subr.mxu0 0.0
  %554 = vmatpush1.msra.mxu0 0.0
  %555 = vmatprep.mubr.f32.mxu0 0.0
  %556 = vmatmul.mubr.f32.gmra.mrb[0].mxu0 %v477
  %v557 = vpop.f32.mrb[0].mxu0
  %v558 = vadd.f32 0.0, %v557
  %v559 = vpop.f32.mrb[0].mxu0
  %560 = vmatprep.mubr.f32.mxu0 0.0
  %561 = vmatmul.mubr.f32.gmra.mrb[0].mxu0 %v480
  %v562 = vpop.f32.mrb[0].mxu0
  %v563 = vadd.f32 0.0, %v562
  %v564 = vpop.f32.mrb[0].mxu0
  %565 = vmatprep.mubr.f32.mxu0 0.0
  %566 = vmatmul.mubr.f32.gmra.mrb[0].mxu0 %v483
  %v567 = vpop.f32.mrb[0].mxu0
  %v568 = vadd.f32 0.0, %v567
  %v569 = vpop.f32.mrb[0].mxu0
  %570 = vmatprep.mubr.f32.mxu0 0.0
  %571 = vmatmul.mubr.f32.gmra.mrb[0].mxu0 %v486
  %v572 = vpop.f32.mrb[0].mxu0
  %v573 = vadd.f32 0.0, %v572
  %v574 = vpop.f32.mrb[0].mxu0
  %575 = vdwg.mxu0
  %v576 = vadd.f32 %v468, %v558
  %v577 = vadd.f32 %v469, %v563
  %v578 = vadd.f32 %v470, %v568
  %v579 = vadd.f32 %v471, %v573
  %vm580 = vcmask 64512
  %v581 = vsel %vm580, %v576, -inf
  %v582 = vrot.slane %v581, 4
  %v583 = vmax.f32 %v581, %v582
  %v584 = vrot.slane %v583, 2
  %v585 = vmax.f32 %v583, %v584
  %v586 = vrot.slane %v585, 1
  %v587 = vmax.f32 %v585, %v586
  %vm588 = vcmp.gt.f32.partialorder %v587, 0.0
  %v589 = vmul.f32 %v587, 0.1
  %v590 = vsel %vm588, %v587, %v589
  %v592 = vsel %vm580, %v590, 0
  %594 = vmatprep.subr.mxu0 0.0
  %595 = vmatpush1.msra.mxu0 %v33
  %596 = vmatprep.subr.mxu0 0.0
  %597 = vmatpush1.msra.mxu0 0.0
  %598 = vmatprep.subr.mxu0 0.0
  %599 = vmatpush1.msra.mxu0 0.0
  %600 = vmatprep.subr.mxu0 0.0
  %601 = vmatpush1.msra.mxu0 0.0
  %602 = vmatprep.subr.mxu0 0.0
  %603 = vmatpush1.msra.mxu0 0.0
  %604 = vmatprep.subr.mxu0 0.0
  %605 = vmatpush1.msra.mxu0 0.0
  %606 = vmatprep.subr.mxu0 0.0
  %607 = vmatpush1.msra.mxu0 0.0
  %608 = vmatprep.subr.mxu0 0.0
  %609 = vmatpush1.msra.mxu0 0.0
  %610 = vmatprep.subr.mxu0 0.0
  %611 = vmatpush1.msra.mxu0 0.0
  %612 = vmatprep.subr.mxu0 0.0
  %613 = vmatpush1.msra.mxu0 0.0
  %614 = vmatprep.subr.mxu0 0.0
  %615 = vmatpush1.msra.mxu0 0.0
  %616 = vmatprep.subr.mxu0 0.0
  %617 = vmatpush1.msra.mxu0 0.0
  %618 = vmatprep.subr.mxu0 0.0
  %619 = vmatpush1.msra.mxu0 0.0
  %620 = vmatprep.subr.mxu0 0.0
  %621 = vmatpush1.msra.mxu0 0.0
  %622 = vmatprep.subr.mxu0 0.0
  %623 = vmatpush1.msra.mxu0 0.0
  %624 = vmatprep.subr.mxu0 0.0
  %625 = vmatpush1.msra.mxu0 0.0
  %626 = vmatprep.subr.mxu0 0.0
  %627 = vmatpush1.msra.mxu0 0.0
  %628 = vmatprep.subr.mxu0 0.0
  %629 = vmatpush1.msra.mxu0 0.0
  %630 = vmatprep.subr.mxu0 0.0
  %631 = vmatpush1.msra.mxu0 0.0
  %632 = vmatprep.subr.mxu0 0.0
  %633 = vmatpush1.msra.mxu0 0.0
  %634 = vmatprep.subr.mxu0 0.0
  %635 = vmatpush1.msra.mxu0 0.0
  %636 = vmatprep.subr.mxu0 0.0
  %637 = vmatpush1.msra.mxu0 0.0
  %638 = vmatprep.subr.mxu0 0.0
  %639 = vmatpush1.msra.mxu0 0.0
  %640 = vmatprep.subr.mxu0 0.0
  %641 = vmatpush1.msra.mxu0 0.0
  %642 = vmatprep.subr.mxu0 0.0
  %643 = vmatpush1.msra.mxu0 0.0
  %644 = vmatprep.subr.mxu0 0.0
  %645 = vmatpush1.msra.mxu0 0.0
  %646 = vmatprep.subr.mxu0 0.0
  %647 = vmatpush1.msra.mxu0 0.0
  %648 = vmatprep.subr.mxu0 0.0
  %649 = vmatpush1.msra.mxu0 0.0
  %650 = vmatprep.subr.mxu0 0.0
  %651 = vmatpush1.msra.mxu0 0.0
  %652 = vmatprep.subr.mxu0 0.0
  %653 = vmatpush1.msra.mxu0 0.0
  %654 = vmatprep.subr.mxu0 0.0
  %655 = vmatpush1.msra.mxu0 0.0
  %656 = vmatprep.subr.mxu0 0.0
  %657 = vmatpush1.msra.mxu0 0.0
  %658 = vmatprep.mubr.f32.mxu0 0.0
  %659 = vmatmul.mubr.f32.gmra.mrb[0].mxu0 %v592
  %v660 = vpop.f32.mrb[0].mxu0
  %v661 = vadd.f32 0.0, %v660
  %v662 = vpop.f32.mrb[0].mxu0
  %663 = vdwg.mxu0
  %v664 = vadd.f32 %v40, %v661
  %v665 = vsel %vm580, %v577, -inf
  %v666 = vrot.slane %v665, 4
  %v667 = vmax.f32 %v665, %v666
  %v668 = vrot.slane %v667, 2
  %v669 = vmax.f32 %v667, %v668
  %v670 = vrot.slane %v669, 1
  %v671 = vmax.f32 %v669, %v670
  %vm672 = vcmp.gt.f32.partialorder %v671, 0.0
  %v673 = vmul.f32 %v671, 0.1
  %v674 = vsel %vm672, %v671, %v673
  %v676 = vsel %vm580, %v674, 0
  %678 = vmatprep.subr.mxu0 0.0
  %679 = vmatpush1.msra.mxu0 %v35
  %680 = vmatprep.subr.mxu0 0.0
  %681 = vmatpush1.msra.mxu0 0.0
  %682 = vmatprep.subr.mxu0 0.0
  %683 = vmatpush1.msra.mxu0 0.0
  %684 = vmatprep.subr.mxu0 0.0
  %685 = vmatpush1.msra.mxu0 0.0
  %686 = vmatprep.subr.mxu0 0.0
  %687 = vmatpush1.msra.mxu0 0.0
  %688 = vmatprep.subr.mxu0 0.0
  %689 = vmatpush1.msra.mxu0 0.0
  %690 = vmatprep.subr.mxu0 0.0
  %691 = vmatpush1.msra.mxu0 0.0
  %692 = vmatprep.subr.mxu0 0.0
  %693 = vmatpush1.msra.mxu0 0.0
  %694 = vmatprep.subr.mxu0 0.0
  %695 = vmatpush1.msra.mxu0 0.0
  %696 = vmatprep.subr.mxu0 0.0
  %697 = vmatpush1.msra.mxu0 0.0
  %698 = vmatprep.subr.mxu0 0.0
  %699 = vmatpush1.msra.mxu0 0.0
  %700 = vmatprep.subr.mxu0 0.0
  %701 = vmatpush1.msra.mxu0 0.0
  %702 = vmatprep.subr.mxu0 0.0
  %703 = vmatpush1.msra.mxu0 0.0
  %704 = vmatprep.subr.mxu0 0.0
  %705 = vmatpush1.msra.mxu0 0.0
  %706 = vmatprep.subr.mxu0 0.0
  %707 = vmatpush1.msra.mxu0 0.0
  %708 = vmatprep.subr.mxu0 0.0
  %709 = vmatpush1.msra.mxu0 0.0
  %710 = vmatprep.subr.mxu0 0.0
  %711 = vmatpush1.msra.mxu0 0.0
  %712 = vmatprep.subr.mxu0 0.0
  %713 = vmatpush1.msra.mxu0 0.0
  %714 = vmatprep.subr.mxu0 0.0
  %715 = vmatpush1.msra.mxu0 0.0
  %716 = vmatprep.subr.mxu0 0.0
  %717 = vmatpush1.msra.mxu0 0.0
  %718 = vmatprep.subr.mxu0 0.0
  %719 = vmatpush1.msra.mxu0 0.0
  %720 = vmatprep.subr.mxu0 0.0
  %721 = vmatpush1.msra.mxu0 0.0
  %722 = vmatprep.subr.mxu0 0.0
  %723 = vmatpush1.msra.mxu0 0.0
  %724 = vmatprep.subr.mxu0 0.0
  %725 = vmatpush1.msra.mxu0 0.0
  %726 = vmatprep.subr.mxu0 0.0
  %727 = vmatpush1.msra.mxu0 0.0
  %728 = vmatprep.subr.mxu0 0.0
  %729 = vmatpush1.msra.mxu0 0.0
  %730 = vmatprep.subr.mxu0 0.0
  %731 = vmatpush1.msra.mxu0 0.0
  %732 = vmatprep.subr.mxu0 0.0
  %733 = vmatpush1.msra.mxu0 0.0
  %734 = vmatprep.subr.mxu0 0.0
  %735 = vmatpush1.msra.mxu0 0.0
  %736 = vmatprep.subr.mxu0 0.0
  %737 = vmatpush1.msra.mxu0 0.0
  %738 = vmatprep.subr.mxu0 0.0
  %739 = vmatpush1.msra.mxu0 0.0
  %740 = vmatprep.subr.mxu0 0.0
  %741 = vmatpush1.msra.mxu0 0.0
  %742 = vmatprep.mubr.f32.mxu0 0.0
  %743 = vmatmul.mubr.f32.gmra.mrb[0].mxu0 %v676
  %v744 = vpop.f32.mrb[0].mxu0
  %v745 = vadd.f32 0.0, %v744
  %v746 = vpop.f32.mrb[0].mxu0
  %747 = vdwg.mxu0
  %v748 = vadd.f32 %v664, %v745
  %v749 = vsel %vm580, %v578, -inf
  %v750 = vrot.slane %v749, 4
  %v751 = vmax.f32 %v749, %v750
  %v752 = vrot.slane %v751, 2
  %v753 = vmax.f32 %v751, %v752
  %v754 = vrot.slane %v753, 1
  %v755 = vmax.f32 %v753, %v754
  %vm756 = vcmp.gt.f32.partialorder %v755, 0.0
  %v757 = vmul.f32 %v755, 0.1
  %v758 = vsel %vm756, %v755, %v757
  %v760 = vsel %vm580, %v758, 0
  %762 = vmatprep.subr.mxu0 0.0
  %763 = vmatpush1.msra.mxu0 %v37
  %764 = vmatprep.subr.mxu0 0.0
  %765 = vmatpush1.msra.mxu0 0.0
  %766 = vmatprep.subr.mxu0 0.0
  %767 = vmatpush1.msra.mxu0 0.0
  %768 = vmatprep.subr.mxu0 0.0
  %769 = vmatpush1.msra.mxu0 0.0
  %770 = vmatprep.subr.mxu0 0.0
  %771 = vmatpush1.msra.mxu0 0.0
  %772 = vmatprep.subr.mxu0 0.0
  %773 = vmatpush1.msra.mxu0 0.0
  %774 = vmatprep.subr.mxu0 0.0
  %775 = vmatpush1.msra.mxu0 0.0
  %776 = vmatprep.subr.mxu0 0.0
  %777 = vmatpush1.msra.mxu0 0.0
  %778 = vmatprep.subr.mxu0 0.0
  %779 = vmatpush1.msra.mxu0 0.0
  %780 = vmatprep.subr.mxu0 0.0
  %781 = vmatpush1.msra.mxu0 0.0
  %782 = vmatprep.subr.mxu0 0.0
  %783 = vmatpush1.msra.mxu0 0.0
  %784 = vmatprep.subr.mxu0 0.0
  %785 = vmatpush1.msra.mxu0 0.0
  %786 = vmatprep.subr.mxu0 0.0
  %787 = vmatpush1.msra.mxu0 0.0
  %788 = vmatprep.subr.mxu0 0.0
  %789 = vmatpush1.msra.mxu0 0.0
  %790 = vmatprep.subr.mxu0 0.0
  %791 = vmatpush1.msra.mxu0 0.0
  %792 = vmatprep.subr.mxu0 0.0
  %793 = vmatpush1.msra.mxu0 0.0
  %794 = vmatprep.subr.mxu0 0.0
  %795 = vmatpush1.msra.mxu0 0.0
  %796 = vmatprep.subr.mxu0 0.0
  %797 = vmatpush1.msra.mxu0 0.0
  %798 = vmatprep.subr.mxu0 0.0
  %799 = vmatpush1.msra.mxu0 0.0
  %800 = vmatprep.subr.mxu0 0.0
  %801 = vmatpush1.msra.mxu0 0.0
  %802 = vmatprep.subr.mxu0 0.0
  %803 = vmatpush1.msra.mxu0 0.0
  %804 = vmatprep.subr.mxu0 0.0
  %805 = vmatpush1.msra.mxu0 0.0
  %806 = vmatprep.subr.mxu0 0.0
  %807 = vmatpush1.msra.mxu0 0.0
  %808 = vmatprep.subr.mxu0 0.0
  %809 = vmatpush1.msra.mxu0 0.0
  %810 = vmatprep.subr.mxu0 0.0
  %811 = vmatpush1.msra.mxu0 0.0
  %812 = vmatprep.subr.mxu0 0.0
  %813 = vmatpush1.msra.mxu0 0.0
  %814 = vmatprep.subr.mxu0 0.0
  %815 = vmatpush1.msra.mxu0 0.0
  %816 = vmatprep.subr.mxu0 0.0
  %817 = vmatpush1.msra.mxu0 0.0
  %818 = vmatprep.subr.mxu0 0.0
  %819 = vmatpush1.msra.mxu0 0.0
  %820 = vmatprep.subr.mxu0 0.0
  %821 = vmatpush1.msra.mxu0 0.0
  %822 = vmatprep.subr.mxu0 0.0
  %823 = vmatpush1.msra.mxu0 0.0
  %824 = vmatprep.subr.mxu0 0.0
  %825 = vmatpush1.msra.mxu0 0.0
  %826 = vmatprep.mubr.f32.mxu0 0.0
  %827 = vmatmul.mubr.f32.gmra.mrb[0].mxu0 %v760
  %v828 = vpop.f32.mrb[0].mxu0
  %v829 = vadd.f32 0.0, %v828
  %v830 = vpop.f32.mrb[0].mxu0
  %831 = vdwg.mxu0
  %v832 = vadd.f32 %v748, %v829
  %v833 = vsel %vm580, %v579, -inf
  %v834 = vrot.slane %v833, 4
  %v835 = vmax.f32 %v833, %v834
  %v836 = vrot.slane %v835, 2
  %v837 = vmax.f32 %v835, %v836
  %v838 = vrot.slane %v837, 1
  %v839 = vmax.f32 %v837, %v838
  %vm840 = vcmp.gt.f32.partialorder %v839, 0.0
  %v841 = vmul.f32 %v839, 0.1
  %v842 = vsel %vm840, %v839, %v841
  %v844 = vsel %vm580, %v842, 0
  %846 = vmatprep.subr.mxu0 0.0
  %847 = vmatpush1.msra.mxu0 %v39
  %848 = vmatprep.subr.mxu0 0.0
  %849 = vmatpush1.msra.mxu0 0.0
  %850 = vmatprep.subr.mxu0 0.0
  %851 = vmatpush1.msra.mxu0 0.0
  %852 = vmatprep.subr.mxu0 0.0
  %853 = vmatpush1.msra.mxu0 0.0
  %854 = vmatprep.subr.mxu0 0.0
  %855 = vmatpush1.msra.mxu0 0.0
  %856 = vmatprep.subr.mxu0 0.0
  %857 = vmatpush1.msra.mxu0 0.0
  %858 = vmatprep.subr.mxu0 0.0
  %859 = vmatpush1.msra.mxu0 0.0
  %860 = vmatprep.subr.mxu0 0.0
  %861 = vmatpush1.msra.mxu0 0.0
  %862 = vmatprep.subr.mxu0 0.0
  %863 = vmatpush1.msra.mxu0 0.0
  %864 = vmatprep.subr.mxu0 0.0
  %865 = vmatpush1.msra.mxu0 0.0
  %866 = vmatprep.subr.mxu0 0.0
  %867 = vmatpush1.msra.mxu0 0.0
  %868 = vmatprep.subr.mxu0 0.0
  %869 = vmatpush1.msra.mxu0 0.0
  %870 = vmatprep.subr.mxu0 0.0
  %871 = vmatpush1.msra.mxu0 0.0
  %872 = vmatprep.subr.mxu0 0.0
  %873 = vmatpush1.msra.mxu0 0.0
  %874 = vmatprep.subr.mxu0 0.0
  %875 = vmatpush1.msra.mxu0 0.0
  %876 = vmatprep.subr.mxu0 0.0
  %877 = vmatpush1.msra.mxu0 0.0
  %878 = vmatprep.subr.mxu0 0.0
  %879 = vmatpush1.msra.mxu0 0.0
  %880 = vmatprep.subr.mxu0 0.0
  %881 = vmatpush1.msra.mxu0 0.0
  %882 = vmatprep.subr.mxu0 0.0
  %883 = vmatpush1.msra.mxu0 0.0
  %884 = vmatprep.subr.mxu0 0.0
  %885 = vmatpush1.msra.mxu0 0.0
  %886 = vmatprep.subr.mxu0 0.0
  %887 = vmatpush1.msra.mxu0 0.0
  %888 = vmatprep.subr.mxu0 0.0
  %889 = vmatpush1.msra.mxu0 0.0
  %890 = vmatprep.subr.mxu0 0.0
  %891 = vmatpush1.msra.mxu0 0.0
  %892 = vmatprep.subr.mxu0 0.0
  %893 = vmatpush1.msra.mxu0 0.0
  %894 = vmatprep.subr.mxu0 0.0
  %895 = vmatpush1.msra.mxu0 0.0
  %896 = vmatprep.subr.mxu0 0.0
  %897 = vmatpush1.msra.mxu0 0.0
  %898 = vmatprep.subr.mxu0 0.0
  %899 = vmatpush1.msra.mxu0 0.0
  %900 = vmatprep.subr.mxu0 0.0
  %901 = vmatpush1.msra.mxu0 0.0
  %902 = vmatprep.subr.mxu0 0.0
  %903 = vmatpush1.msra.mxu0 0.0
  %904 = vmatprep.subr.mxu0 0.0
  %905 = vmatpush1.msra.mxu0 0.0
  %906 = vmatprep.subr.mxu0 0.0
  %907 = vmatpush1.msra.mxu0 0.0
  %908 = vmatprep.subr.mxu0 0.0
  %909 = vmatpush1.msra.mxu0 0.0
  %910 = vmatprep.mubr.f32.mxu0 0.0
  %911 = vmatmul.mubr.f32.gmra.mrb[0].mxu0 %v844
  %v912 = vpop.f32.mrb[0].mxu0
  %v913 = vadd.f32 0.0, %v912
  %v914 = vpop.f32.mrb[0].mxu0
  %915 = vdwg.mxu0
  %v916 = vadd.f32 %v832, %v913
  %vm917 = vcmp.gt.f32.partialorder %v916, 0.0
  %v918 = vmul.f32 %v916, 0.1
  %v919 = vsel %vm917, %v916, %v918
  %v920 = vstv %s45
  %vm921 = vcmask 261120
  %v923 = vsel %vm921, %v919, 0
  %925 = vmatprep.subr.mxu0 0.0
  %926 = vmatpush1.msra.mxu0 %v41
  %927 = vmatprep.subr.mxu0 0.0
  %928 = vmatpush1.msra.mxu0 %v42
  %929 = vmatprep.subr.mxu0 0.0
  %930 = vmatpush1.msra.mxu0 %v43
  %931 = vmatprep.subr.mxu0 0.0
  %932 = vmatpush1.msra.mxu0 %v44
  %933 = vmatprep.subr.mxu0 0.0
  %934 = vmatpush1.msra.mxu0 0.0
  %935 = vmatprep.subr.mxu0 0.0
  %936 = vmatpush1.msra.mxu0 0.0
  %937 = vmatprep.subr.mxu0 0.0
  %938 = vmatpush1.msra.mxu0 0.0
  %939 = vmatprep.subr.mxu0 0.0
  %940 = vmatpush1.msra.mxu0 0.0
  %941 = vmatprep.subr.mxu0 0.0
  %942 = vmatpush1.msra.mxu0 0.0
  %943 = vmatprep.subr.mxu0 0.0
  %944 = vmatpush1.msra.mxu0 0.0
  %945 = vmatprep.subr.mxu0 0.0
  %946 = vmatpush1.msra.mxu0 0.0
  %947 = vmatprep.subr.mxu0 0.0
  %948 = vmatpush1.msra.mxu0 0.0
  %949 = vmatprep.subr.mxu0 0.0
  %950 = vmatpush1.msra.mxu0 0.0
  %951 = vmatprep.subr.mxu0 0.0
  %952 = vmatpush1.msra.mxu0 0.0
  %953 = vmatprep.subr.mxu0 0.0
  %954 = vmatpush1.msra.mxu0 0.0
  %955 = vmatprep.subr.mxu0 0.0
  %956 = vmatpush1.msra.mxu0 0.0
  %957 = vmatprep.subr.mxu0 0.0
  %958 = vmatpush1.msra.mxu0 0.0
  %959 = vmatprep.subr.mxu0 0.0
  %960 = vmatpush1.msra.mxu0 0.0
  %961 = vmatprep.subr.mxu0 0.0
  %962 = vmatpush1.msra.mxu0 0.0
  %963 = vmatprep.subr.mxu0 0.0
  %964 = vmatpush1.msra.mxu0 0.0
  %965 = vmatprep.subr.mxu0 0.0
  %966 = vmatpush1.msra.mxu0 0.0
  %967 = vmatprep.subr.mxu0 0.0
  %968 = vmatpush1.msra.mxu0 0.0
  %969 = vmatprep.subr.mxu0 0.0
  %970 = vmatpush1.msra.mxu0 0.0
  %971 = vmatprep.subr.mxu0 0.0
  %972 = vmatpush1.msra.mxu0 0.0
  %973 = vmatprep.subr.mxu0 0.0
  %974 = vmatpush1.msra.mxu0 0.0
  %975 = vmatprep.subr.mxu0 0.0
  %976 = vmatpush1.msra.mxu0 0.0
  %977 = vmatprep.subr.mxu0 0.0
  %978 = vmatpush1.msra.mxu0 0.0
  %979 = vmatprep.subr.mxu0 0.0
  %980 = vmatpush1.msra.mxu0 0.0
  %981 = vmatprep.subr.mxu0 0.0
  %982 = vmatpush1.msra.mxu0 0.0
  %983 = vmatprep.subr.mxu0 0.0
  %984 = vmatpush1.msra.mxu0 0.0
  %985 = vmatprep.subr.mxu0 0.0
  %986 = vmatpush1.msra.mxu0 0.0
  %987 = vmatprep.subr.mxu0 0.0
  %988 = vmatpush1.msra.mxu0 0.0
  %989 = vmatprep.mubr.f32.mxu0 0.0
  %990 = vmatmul.mubr.f32.gmra.mrb[0].mxu0 %v923
  %v991 = vpop.f32.mrb[0].mxu0
  %v992 = vadd.f32 %v920, %v991
  %v993 = vpop.f32.mrb[0].mxu0
  %994 = vdwg.mxu0
  %vm995 = vcmask 0
  %996 = vst.msk [vmem:[%s6] sm:$0x1] %vm995, %v992
  %s997 = scalar_lea.vmem %s0, 40
  %v998 = vld [vmem:[%s997] sm:$0xff]
  %v999 = vld [vmem:[%s997 + $0x8] sm:$0xff]
  %v1000 = vld [vmem:[%s997 + $0x10] sm:$0xff]
  %v1001 = vld [vmem:[%s997 + $0x18] sm:$0xff]
  %v1002 = vld [vmem:[%s997 + $0x1] sm:$0xff]
  %v1003 = vld [vmem:[%s997 + $0x9] sm:$0xff]
  %v1004 = vld [vmem:[%s997 + $0x11] sm:$0xff]
  %v1005 = vld [vmem:[%s997 + $0x19] sm:$0xff]
  %v1007 = vsel %vm54, %v1002, 0
  %v1010 = vsel %vm54, %v1003, 0
  %v1013 = vsel %vm54, %v1004, 0
  %v1016 = vsel %vm54, %v1005, 0
  %1018 = vmatprep.subr.mxu0 0.0
  %1019 = vmatpush1.msra.mxu0 %v69
  %1020 = vmatprep.subr.mxu0 0.0
  %1021 = vmatpush1.msra.mxu0 0.0
  %1022 = vmatprep.subr.mxu0 0.0
  %1023 = vmatpush1.msra.mxu0 0.0
  %1024 = vmatprep.subr.mxu0 0.0
  %1025 = vmatpush1.msra.mxu0 0.0
  %1026 = vmatprep.subr.mxu0 0.0
  %1027 = vmatpush1.msra.mxu0 0.0
  %1028 = vmatprep.subr.mxu0 0.0
  %1029 = vmatpush1.msra.mxu0 0.0
  %1030 = vmatprep.subr.mxu0 0.0
  %1031 = vmatpush1.msra.mxu0 0.0
  %1032 = vmatprep.subr.mxu0 0.0
  %1033 = vmatpush1.msra.mxu0 0.0
  %1034 = vmatprep.subr.mxu0 0.0
  %1035 = vmatpush1.msra.mxu0 0.0
  %1036 = vmatprep.subr.mxu0 0.0
  %1037 = vmatpush1.msra.mxu0 0.0
  %1038 = vmatprep.subr.mxu0 0.0
  %1039 = vmatpush1.msra.mxu0 0.0
  %1040 = vmatprep.subr.mxu0 0.0
  %1041 = vmatpush1.msra.mxu0 0.0
  %1042 = vmatprep.subr.mxu0 0.0
  %1043 = vmatpush1.msra.mxu0 0.0
  %1044 = vmatprep.subr.mxu0 0.0
  %1045 = vmatpush1.msra.mxu0 0.0
  %1046 = vmatprep.subr.mxu0 0.0
  %1047 = vmatpush1.msra.mxu0 0.0
  %1048 = vmatprep.subr.mxu0 0.0
  %1049 = vmatpush1.msra.mxu0 0.0
  %1050 = vmatprep.subr.mxu0 0.0
  %1051 = vmatpush1.msra.mxu0 0.0
  %1052 = vmatprep.subr.mxu0 0.0
  %1053 = vmatpush1.msra.mxu0 0.0
  %1054 = vmatprep.subr.mxu0 0.0
  %1055 = vmatpush1.msra.mxu0 0.0
  %1056 = vmatprep.subr.mxu0 0.0
  %1057 = vmatpush1.msra.mxu0 0.0
  %1058 = vmatprep.subr.mxu0 0.0
  %1059 = vmatpush1.msra.mxu0 0.0
  %1060 = vmatprep.subr.mxu0 0.0
  %1061 = vmatpush1.msra.mxu0 0.0
  %1062 = vmatprep.subr.mxu0 0.0
  %1063 = vmatpush1.msra.mxu0 0.0
  %1064 = vmatprep.subr.mxu0 0.0
  %1065 = vmatpush1.msra.mxu0 0.0
  %1066 = vmatprep.subr.mxu0 0.0
  %1067 = vmatpush1.msra.mxu0 0.0
  %1068 = vmatprep.subr.mxu0 0.0
  %1069 = vmatpush1.msra.mxu0 0.0
  %1070 = vmatprep.subr.mxu0 0.0
  %1071 = vmatpush1.msra.mxu0 0.0
  %1072 = vmatprep.subr.mxu0 0.0
  %1073 = vmatpush1.msra.mxu0 0.0
  %1074 = vmatprep.subr.mxu0 0.0
  %1075 = vmatpush1.msra.mxu0 0.0
  %1076 = vmatprep.subr.mxu0 0.0
  %1077 = vmatpush1.msra.mxu0 0.0
  %1078 = vmatprep.subr.mxu0 0.0
  %1079 = vmatpush1.msra.mxu0 0.0
  %1080 = vmatprep.subr.mxu0 0.0
  %1081 = vmatpush1.msra.mxu0 0.0
  %1082 = vmatprep.mubr.f32.mxu0 0.0
  %1083 = vmatmul.mubr.f32.gmra.mrb[0].mxu0 %v1007
  %v1084 = vpop.f32.mrb[0].mxu0
  %v1085 = vadd.f32 0.0, %v1084
  %v1086 = vpop.f32.mrb[0].mxu0
  %1087 = vmatprep.mubr.f32.mxu0 0.0
  %1088 = vmatmul.mubr.f32.gmra.mrb[0].mxu0 %v1010
  %v1089 = vpop.f32.mrb[0].mxu0
  %v1090 = vadd.f32 0.0, %v1089
  %v1091 = vpop.f32.mrb[0].mxu0
  %1092 = vmatprep.mubr.f32.mxu0 0.0
  %1093 = vmatmul.mubr.f32.gmra.mrb[0].mxu0 %v1013
  %v1094 = vpop.f32.mrb[0].mxu0
  %v1095 = vadd.f32 0.0, %v1094
  %v1096 = vpop.f32.mrb[0].mxu0
  %1097 = vmatprep.mubr.f32.mxu0 0.0
  %1098 = vmatmul.mubr.f32.gmra.mrb[0].mxu0 %v1016
  %v1099 = vpop.f32.mrb[0].mxu0
  %v1100 = vadd.f32 0.0, %v1099
  %v1101 = vpop.f32.mrb[0].mxu0
  %1102 = vdwg.mxu0
  %v1104 = vsel %vm54, %v998, 0
  %v1107 = vsel %vm54, %v999, 0
  %v1110 = vsel %vm54, %v1000, 0
  %v1113 = vsel %vm54, %v1001, 0
  %1115 = vmatprep.subr.mxu0 0.0
  %1116 = vmatpush1.msra.mxu0 %v169
  %1117 = vmatprep.subr.mxu0 0.0
  %1118 = vmatpush1.msra.mxu0 0.0
  %1119 = vmatprep.subr.mxu0 0.0
  %1120 = vmatpush1.msra.mxu0 0.0
  %1121 = vmatprep.subr.mxu0 0.0
  %1122 = vmatpush1.msra.mxu0 0.0
  %1123 = vmatprep.subr.mxu0 0.0
  %1124 = vmatpush1.msra.mxu0 0.0
  %1125 = vmatprep.subr.mxu0 0.0
  %1126 = vmatpush1.msra.mxu0 0.0
  %1127 = vmatprep.subr.mxu0 0.0
  %1128 = vmatpush1.msra.mxu0 0.0
  %1129 = vmatprep.subr.mxu0 0.0
  %1130 = vmatpush1.msra.mxu0 0.0
  %1131 = vmatprep.subr.mxu0 0.0
  %1132 = vmatpush1.msra.mxu0 0.0
  %1133 = vmatprep.subr.mxu0 0.0
  %1134 = vmatpush1.msra.mxu0 0.0
  %1135 = vmatprep.subr.mxu0 0.0
  %1136 = vmatpush1.msra.mxu0 0.0
  %1137 = vmatprep.subr.mxu0 0.0
  %1138 = vmatpush1.msra.mxu0 0.0
  %1139 = vmatprep.subr.mxu0 0.0
  %1140 = vmatpush1.msra.mxu0 0.0
  %1141 = vmatprep.subr.mxu0 0.0
  %1142 = vmatpush1.msra.mxu0 0.0
  %1143 = vmatprep.subr.mxu0 0.0
  %1144 = vmatpush1.msra.mxu0 0.0
  %1145 = vmatprep.subr.mxu0 0.0
  %1146 = vmatpush1.msra.mxu0 0.0
  %1147 = vmatprep.subr.mxu0 0.0
  %1148 = vmatpush1.msra.mxu0 0.0
  %1149 = vmatprep.subr.mxu0 0.0
  %1150 = vmatpush1.msra.mxu0 0.0
  %1151 = vmatprep.subr.mxu0 0.0
  %1152 = vmatpush1.msra.mxu0 0.0
  %1153 = vmatprep.subr.mxu0 0.0
  %1154 = vmatpush1.msra.mxu0 0.0
  %1155 = vmatprep.subr.mxu0 0.0
  %1156 = vmatpush1.msra.mxu0 0.0
  %1157 = vmatprep.subr.mxu0 0.0
  %1158 = vmatpush1.msra.mxu0 0.0
  %1159 = vmatprep.subr.mxu0 0.0
  %1160 = vmatpush1.msra.mxu0 0.0
  %1161 = vmatprep.subr.mxu0 0.0
  %1162 = vmatpush1.msra.mxu0 0.0
  %1163 = vmatprep.subr.mxu0 0.0
  %1164 = vmatpush1.msra.mxu0 0.0
  %1165 = vmatprep.subr.mxu0 0.0
  %1166 = vmatpush1.msra.mxu0 0.0
  %1167 = vmatprep.subr.mxu0 0.0
  %1168 = vmatpush1.msra.mxu0 0.0
  %1169 = vmatprep.subr.mxu0 0.0
  %1170 = vmatpush1.msra.mxu0 0.0
  %1171 = vmatprep.subr.mxu0 0.0
  %1172 = vmatpush1.msra.mxu0 0.0
  %1173 = vmatprep.subr.mxu0 0.0
  %1174 = vmatpush1.msra.mxu0 0.0
  %1175 = vmatprep.subr.mxu0 0.0
  %1176 = vmatpush1.msra.mxu0 0.0
  %1177 = vmatprep.subr.mxu0 0.0
  %1178 = vmatpush1.msra.mxu0 0.0
  %1179 = vmatprep.mubr.f32.mxu0 0.0
  %1180 = vmatmul.mubr.f32.gmra.mrb[0].mxu0 %v1104
  %v1181 = vpop.f32.mrb[0].mxu0
  %v1182 = vadd.f32 %v1085, %v1181
  %v1183 = vpop.f32.mrb[0].mxu0
  %1184 = vmatprep.mubr.f32.mxu0 0.0
  %1185 = vmatmul.mubr.f32.gmra.mrb[0].mxu0 %v1107
  %v1186 = vpop.f32.mrb[0].mxu0
  %v1187 = vadd.f32 %v1090, %v1186
  %v1188 = vpop.f32.mrb[0].mxu0
  %1189 = vmatprep.mubr.f32.mxu0 0.0
  %1190 = vmatmul.mubr.f32.gmra.mrb[0].mxu0 %v1110
  %v1191 = vpop.f32.mrb[0].mxu0
  %v1192 = vadd.f32 %v1095, %v1191
  %v1193 = vpop.f32.mrb[0].mxu0
  %1194 = vmatprep.mubr.f32.mxu0 0.0
  %1195 = vmatmul.mubr.f32.gmra.mrb[0].mxu0 %v1113
  %v1196 = vpop.f32.mrb[0].mxu0
  %v1197 = vadd.f32 %v1100, %v1196
  %v1198 = vpop.f32.mrb[0].mxu0
  %1199 = vdwg.mxu0
  %v1200 = vld [vmem:[%s997 + $0x2] sm:$0xff]
  %v1201 = vld [vmem:[%s997 + $0xa] sm:$0xff]
  %v1202 = vld [vmem:[%s997 + $0x12] sm:$0xff]
  %v1203 = vld [vmem:[%s997 + $0x1a] sm:$0xff]
  %v1205 = vsel %vm54, %v1200, 0
  %v1208 = vsel %vm54, %v1201, 0
  %v1211 = vsel %vm54, %v1202, 0
  %v1214 = vsel %vm54, %v1203, 0
  %1216 = vmatprep.subr.mxu0 0.0
  %1217 = vmatpush1.msra.mxu0 %v273
  %1218 = vmatprep.subr.mxu0 0.0
  %1219 = vmatpush1.msra.mxu0 0.0
  %1220 = vmatprep.subr.mxu0 0.0
  %1221 = vmatpush1.msra.mxu0 0.0
  %1222 = vmatprep.subr.mxu0 0.0
  %1223 = vmatpush1.msra.mxu0 0.0
  %1224 = vmatprep.subr.mxu0 0.0
  %1225 = vmatpush1.msra.mxu0 0.0
  %1226 = vmatprep.subr.mxu0 0.0
  %1227 = vmatpush1.msra.mxu0 0.0
  %1228 = vmatprep.subr.mxu0 0.0
  %1229 = vmatpush1.msra.mxu0 0.0
  %1230 = vmatprep.subr.mxu0 0.0
  %1231 = vmatpush1.msra.mxu0 0.0
  %1232 = vmatprep.subr.mxu0 0.0
  %1233 = vmatpush1.msra.mxu0 0.0
  %1234 = vmatprep.subr.mxu0 0.0
  %1235 = vmatpush1.msra.mxu0 0.0
  %1236 = vmatprep.subr.mxu0 0.0
  %1237 = vmatpush1.msra.mxu0 0.0
  %1238 = vmatprep.subr.mxu0 0.0
  %1239 = vmatpush1.msra.mxu0 0.0
  %1240 = vmatprep.subr.mxu0 0.0
  %1241 = vmatpush1.msra.mxu0 0.0
  %1242 = vmatprep.subr.mxu0 0.0
  %1243 = vmatpush1.msra.mxu0 0.0
  %1244 = vmatprep.subr.mxu0 0.0
  %1245 = vmatpush1.msra.mxu0 0.0
  %1246 = vmatprep.subr.mxu0 0.0
  %1247 = vmatpush1.msra.mxu0 0.0
  %1248 = vmatprep.subr.mxu0 0.0
  %1249 = vmatpush1.msra.mxu0 0.0
  %1250 = vmatprep.subr.mxu0 0.0
  %1251 = vmatpush1.msra.mxu0 0.0
  %1252 = vmatprep.subr.mxu0 0.0
  %1253 = vmatpush1.msra.mxu0 0.0
  %1254 = vmatprep.subr.mxu0 0.0
  %1255 = vmatpush1.msra.mxu0 0.0
  %1256 = vmatprep.subr.mxu0 0.0
  %1257 = vmatpush1.msra.mxu0 0.0
  %1258 = vmatprep.subr.mxu0 0.0
  %1259 = vmatpush1.msra.mxu0 0.0
  %1260 = vmatprep.subr.mxu0 0.0
  %1261 = vmatpush1.msra.mxu0 0.0
  %1262 = vmatprep.subr.mxu0 0.0
  %1263 = vmatpush1.msra.mxu0 0.0
  %1264 = vmatprep.subr.mxu0 0.0
  %1265 = vmatpush1.msra.mxu0 0.0
  %1266 = vmatprep.subr.mxu0 0.0
  %1267 = vmatpush1.msra.mxu0 0.0
  %1268 = vmatprep.subr.mxu0 0.0
  %1269 = vmatpush1.msra.mxu0 0.0
  %1270 = vmatprep.subr.mxu0 0.0
  %1271 = vmatpush1.msra.mxu0 0.0
  %1272 = vmatprep.subr.mxu0 0.0
  %1273 = vmatpush1.msra.mxu0 0.0
  %1274 = vmatprep.subr.mxu0 0.0
  %1275 = vmatpush1.msra.mxu0 0.0
  %1276 = vmatprep.subr.mxu0 0.0
  %1277 = vmatpush1.msra.mxu0 0.0
  %1278 = vmatprep.subr.mxu0 0.0
  %1279 = vmatpush1.msra.mxu0 0.0
  %1280 = vmatprep.mubr.f32.mxu0 0.0
  %1281 = vmatmul.mubr.f32.gmra.mrb[0].mxu0 %v1205
  %v1282 = vpop.f32.mrb[0].mxu0
  %v1283 = vadd.f32 0.0, %v1282
  %v1284 = vpop.f32.mrb[0].mxu0
  %1285 = vmatprep.mubr.f32.mxu0 0.0
  %1286 = vmatmul.mubr.f32.gmra.mrb[0].mxu0 %v1208
  %v1287 = vpop.f32.mrb[0].mxu0
  %v1288 = vadd.f32 0.0, %v1287
  %v1289 = vpop.f32.mrb[0].mxu0
  %1290 = vmatprep.mubr.f32.mxu0 0.0
  %1291 = vmatmul.mubr.f32.gmra.mrb[0].mxu0 %v1211
  %v1292 = vpop.f32.mrb[0].mxu0
  %v1293 = vadd.f32 0.0, %v1292
  %v1294 = vpop.f32.mrb[0].mxu0
  %1295 = vmatprep.mubr.f32.mxu0 0.0
  %1296 = vmatmul.mubr.f32.gmra.mrb[0].mxu0 %v1214
  %v1297 = vpop.f32.mrb[0].mxu0
  %v1298 = vadd.f32 0.0, %v1297
  %v1299 = vpop.f32.mrb[0].mxu0
  %1300 = vdwg.mxu0
  %v1301 = vadd.f32 %v1182, %v1283
  %v1302 = vadd.f32 %v1187, %v1288
  %v1303 = vadd.f32 %v1192, %v1293
  %v1304 = vadd.f32 %v1197, %v1298
  %v1305 = vld [vmem:[%s997 + $0x3] sm:$0xff]
  %v1306 = vld [vmem:[%s997 + $0xb] sm:$0xff]
  %v1307 = vld [vmem:[%s997 + $0x13] sm:$0xff]
  %v1308 = vld [vmem:[%s997 + $0x1b] sm:$0xff]
  %v1310 = vsel %vm54, %v1305, 0
  %v1313 = vsel %vm54, %v1306, 0
  %v1316 = vsel %vm54, %v1307, 0
  %v1319 = vsel %vm54, %v1308, 0
  %1321 = vmatprep.subr.mxu0 0.0
  %1322 = vmatpush1.msra.mxu0 %v381
  %1323 = vmatprep.subr.mxu0 0.0
  %1324 = vmatpush1.msra.mxu0 0.0
  %1325 = vmatprep.subr.mxu0 0.0
  %1326 = vmatpush1.msra.mxu0 0.0
  %1327 = vmatprep.subr.mxu0 0.0
  %1328 = vmatpush1.msra.mxu0 0.0
  %1329 = vmatprep.subr.mxu0 0.0
  %1330 = vmatpush1.msra.mxu0 0.0
  %1331 = vmatprep.subr.mxu0 0.0
  %1332 = vmatpush1.msra.mxu0 0.0
  %1333 = vmatprep.subr.mxu0 0.0
  %1334 = vmatpush1.msra.mxu0 0.0
  %1335 = vmatprep.subr.mxu0 0.0
  %1336 = vmatpush1.msra.mxu0 0.0
  %1337 = vmatprep.subr.mxu0 0.0
  %1338 = vmatpush1.msra.mxu0 0.0
  %1339 = vmatprep.subr.mxu0 0.0
  %1340 = vmatpush1.msra.mxu0 0.0
  %1341 = vmatprep.subr.mxu0 0.0
  %1342 = vmatpush1.msra.mxu0 0.0
  %1343 = vmatprep.subr.mxu0 0.0
  %1344 = vmatpush1.msra.mxu0 0.0
  %1345 = vmatprep.subr.mxu0 0.0
  %1346 = vmatpush1.msra.mxu0 0.0
  %1347 = vmatprep.subr.mxu0 0.0
  %1348 = vmatpush1.msra.mxu0 0.0
  %1349 = vmatprep.subr.mxu0 0.0
  %1350 = vmatpush1.msra.mxu0 0.0
  %1351 = vmatprep.subr.mxu0 0.0
  %1352 = vmatpush1.msra.mxu0 0.0
  %1353 = vmatprep.subr.mxu0 0.0
  %1354 = vmatpush1.msra.mxu0 0.0
  %1355 = vmatprep.subr.mxu0 0.0
  %1356 = vmatpush1.msra.mxu0 0.0
  %1357 = vmatprep.subr.mxu0 0.0
  %1358 = vmatpush1.msra.mxu0 0.0
  %1359 = vmatprep.subr.mxu0 0.0
  %1360 = vmatpush1.msra.mxu0 0.0
  %1361 = vmatprep.subr.mxu0 0.0
  %1362 = vmatpush1.msra.mxu0 0.0
  %1363 = vmatprep.subr.mxu0 0.0
  %1364 = vmatpush1.msra.mxu0 0.0
  %1365 = vmatprep.subr.mxu0 0.0
  %1366 = vmatpush1.msra.mxu0 0.0
  %1367 = vmatprep.subr.mxu0 0.0
  %1368 = vmatpush1.msra.mxu0 0.0
  %1369 = vmatprep.subr.mxu0 0.0
  %1370 = vmatpush1.msra.mxu0 0.0
  %1371 = vmatprep.subr.mxu0 0.0
  %1372 = vmatpush1.msra.mxu0 0.0
  %1373 = vmatprep.subr.mxu0 0.0
  %1374 = vmatpush1.msra.mxu0 0.0
  %1375 = vmatprep.subr.mxu0 0.0
  %1376 = vmatpush1.msra.mxu0 0.0
  %1377 = vmatprep.subr.mxu0 0.0
  %1378 = vmatpush1.msra.mxu0 0.0
  %1379 = vmatprep.subr.mxu0 0.0
  %1380 = vmatpush1.msra.mxu0 0.0
  %1381 = vmatprep.subr.mxu0 0.0
  %1382 = vmatpush1.msra.mxu0 0.0
  %1383 = vmatprep.subr.mxu0 0.0
  %1384 = vmatpush1.msra.mxu0 0.0
  %1385 = vmatprep.mubr.f32.mxu0 0.0
  %1386 = vmatmul.mubr.f32.gmra.mrb[0].mxu0 %v1310
  %v1387 = vpop.f32.mrb[0].mxu0
  %v1388 = vadd.f32 0.0, %v1387
  %v1389 = vpop.f32.mrb[0].mxu0
  %1390 = vmatprep.mubr.f32.mxu0 0.0
  %1391 = vmatmul.mubr.f32.gmra.mrb[0].mxu0 %v1313
  %v1392 = vpop.f32.mrb[0].mxu0
  %v1393 = vadd.f32 0.0, %v1392
  %v1394 = vpop.f32.mrb[0].mxu0
  %1395 = vmatprep.mubr.f32.mxu0 0.0
  %1396 = vmatmul.mubr.f32.gmra.mrb[0].mxu0 %v1316
  %v1397 = vpop.f32.mrb[0].mxu0
  %v1398 = vadd.f32 0.0, %v1397
  %v1399 = vpop.f32.mrb[0].mxu0
  %1400 = vmatprep.mubr.f32.mxu0 0.0
  %1401 = vmatmul.mubr.f32.gmra.mrb[0].mxu0 %v1319
  %v1402 = vpop.f32.mrb[0].mxu0
  %v1403 = vadd.f32 0.0, %v1402
  %v1404 = vpop.f32.mrb[0].mxu0
  %1405 = vdwg.mxu0
  %v1406 = vadd.f32 %v1301, %v1388
  %v1407 = vadd.f32 %v1302, %v1393
  %v1408 = vadd.f32 %v1303, %v1398
  %v1409 = vadd.f32 %v1304, %v1403
  %v1410 = vld [vmem:[%s997 + $0x4] sm:$0xff]
  %v1411 = vld [vmem:[%s997 + $0xc] sm:$0xff]
  %v1412 = vld [vmem:[%s997 + $0x14] sm:$0xff]
  %v1413 = vld [vmem:[%s997 + $0x1c] sm:$0xff]
  %v1415 = vsel %vm54, %v1410, 0
  %v1418 = vsel %vm54, %v1411, 0
  %v1421 = vsel %vm54, %v1412, 0
  %v1424 = vsel %vm54, %v1413, 0
  %1426 = vmatprep.subr.mxu0 0.0
  %1427 = vmatpush1.msra.mxu0 %v489
  %1428 = vmatprep.subr.mxu0 0.0
  %1429 = vmatpush1.msra.mxu0 0.0
  %1430 = vmatprep.subr.mxu0 0.0
  %1431 = vmatpush1.msra.mxu0 0.0
  %1432 = vmatprep.subr.mxu0 0.0
  %1433 = vmatpush1.msra.mxu0 0.0
  %1434 = vmatprep.subr.mxu0 0.0
  %1435 = vmatpush1.msra.mxu0 0.0
  %1436 = vmatprep.subr.mxu0 0.0
  %1437 = vmatpush1.msra.mxu0 0.0
  %1438 = vmatprep.subr.mxu0 0.0
  %1439 = vmatpush1.msra.mxu0 0.0
  %1440 = vmatprep.subr.mxu0 0.0
  %1441 = vmatpush1.msra.mxu0 0.0
  %1442 = vmatprep.subr.mxu0 0.0
  %1443 = vmatpush1.msra.mxu0 0.0
  %1444 = vmatprep.subr.mxu0 0.0
  %1445 = vmatpush1.msra.mxu0 0.0
  %1446 = vmatprep.subr.mxu0 0.0
  %1447 = vmatpush1.msra.mxu0 0.0
  %1448 = vmatprep.subr.mxu0 0.0
  %1449 = vmatpush1.msra.mxu0 0.0
  %1450 = vmatprep.subr.mxu0 0.0
  %1451 = vmatpush1.msra.mxu0 0.0
  %1452 = vmatprep.subr.mxu0 0.0
  %1453 = vmatpush1.msra.mxu0 0.0
  %1454 = vmatprep.subr.mxu0 0.0
  %1455 = vmatpush1.msra.mxu0 0.0
  %1456 = vmatprep.subr.mxu0 0.0
  %1457 = vmatpush1.msra.mxu0 0.0
  %1458 = vmatprep.subr.mxu0 0.0
  %1459 = vmatpush1.msra.mxu0 0.0
  %1460 = vmatprep.subr.mxu0 0.0
  %1461 = vmatpush1.msra.mxu0 0.0
  %1462 = vmatprep.subr.mxu0 0.0
  %1463 = vmatpush1.msra.mxu0 0.0
  %1464 = vmatprep.subr.mxu0 0.0
  %1465 = vmatpush1.msra.mxu0 0.0
  %1466 = vmatprep.subr.mxu0 0.0
  %1467 = vmatpush1.msra.mxu0 0.0
  %1468 = vmatprep.subr.mxu0 0.0
  %1469 = vmatpush1.msra.mxu0 0.0
  %1470 = vmatprep.subr.mxu0 0.0
  %1471 = vmatpush1.msra.mxu0 0.0
  %1472 = vmatprep.subr.mxu0 0.0
  %1473 = vmatpush1.msra.mxu0 0.0
  %1474 = vmatprep.subr.mxu0 0.0
  %1475 = vmatpush1.msra.mxu0 0.0
  %1476 = vmatprep.subr.mxu0 0.0
  %1477 = vmatpush1.msra.mxu0 0.0
  %1478 = vmatprep.subr.mxu0 0.0
  %1479 = vmatpush1.msra.mxu0 0.0
  %1480 = vmatprep.subr.mxu0 0.0
  %1481 = vmatpush1.msra.mxu0 0.0
  %1482 = vmatprep.subr.mxu0 0.0
  %1483 = vmatpush1.msra.mxu0 0.0
  %1484 = vmatprep.subr.mxu0 0.0
  %1485 = vmatpush1.msra.mxu0 0.0
  %1486 = vmatprep.subr.mxu0 0.0
  %1487 = vmatpush1.msra.mxu0 0.0
  %1488 = vmatprep.subr.mxu0 0.0
  %1489 = vmatpush1.msra.mxu0 0.0
  %1490 = vmatprep.mubr.f32.mxu0 0.0
  %1491 = vmatmul.mubr.f32.gmra.mrb[0].mxu0 %v1415
  %v1492 = vpop.f32.mrb[0].mxu0
  %v1493 = vadd.f32 0.0, %v1492
  %v1494 = vpop.f32.mrb[0].mxu0
  %1495 = vmatprep.mubr.f32.mxu0 0.0
  %1496 = vmatmul.mubr.f32.gmra.mrb[0].mxu0 %v1418
  %v1497 = vpop.f32.mrb[0].mxu0
  %v1498 = vadd.f32 0.0, %v1497
  %v1499 = vpop.f32.mrb[0].mxu0
  %1500 = vmatprep.mubr.f32.mxu0 0.0
  %1501 = vmatmul.mubr.f32.gmra.mrb[0].mxu0 %v1421
  %v1502 = vpop.f32.mrb[0].mxu0
  %v1503 = vadd.f32 0.0, %v1502
  %v1504 = vpop.f32.mrb[0].mxu0
  %1505 = vmatprep.mubr.f32.mxu0 0.0
  %1506 = vmatmul.mubr.f32.gmra.mrb[0].mxu0 %v1424
  %v1507 = vpop.f32.mrb[0].mxu0
  %v1508 = vadd.f32 0.0, %v1507
  %v1509 = vpop.f32.mrb[0].mxu0
  %1510 = vdwg.mxu0
  %v1511 = vadd.f32 %v1406, %v1493
  %v1512 = vadd.f32 %v1407, %v1498
  %v1513 = vadd.f32 %v1408, %v1503
  %v1514 = vadd.f32 %v1409, %v1508
  %v1515 = vsel %vm580, %v1511, -inf
  %v1516 = vrot.slane %v1515, 4
  %v1517 = vmax.f32 %v1515, %v1516
  %v1518 = vrot.slane %v1517, 2
  %v1519 = vmax.f32 %v1517, %v1518
  %v1520 = vrot.slane %v1519, 1
  %v1521 = vmax.f32 %v1519, %v1520
  %vm1522 = vcmp.gt.f32.partialorder %v1521, 0.0
  %v1523 = vmul.f32 %v1521, 0.1
  %v1524 = vsel %vm1522, %v1521, %v1523
  %v1526 = vsel %vm580, %v1524, 0
  %1528 = vmatprep.subr.mxu0 0.0
  %1529 = vmatpush1.msra.mxu0 %v33
  %1530 = vmatprep.subr.mxu0 0.0
  %1531 = vmatpush1.msra.mxu0 0.0
  %1532 = vmatprep.subr.mxu0 0.0
  %1533 = vmatpush1.msra.mxu0 0.0
  %1534 = vmatprep.subr.mxu0 0.0
  %1535 = vmatpush1.msra.mxu0 0.0
  %1536 = vmatprep.subr.mxu0 0.0
  %1537 = vmatpush1.msra.mxu0 0.0
  %1538 = vmatprep.subr.mxu0 0.0
  %1539 = vmatpush1.msra.mxu0 0.0
  %1540 = vmatprep.subr.mxu0 0.0
  %1541 = vmatpush1.msra.mxu0 0.0
  %1542 = vmatprep.subr.mxu0 0.0
  %1543 = vmatpush1.msra.mxu0 0.0
  %1544 = vmatprep.subr.mxu0 0.0
  %1545 = vmatpush1.msra.mxu0 0.0
  %1546 = vmatprep.subr.mxu0 0.0
  %1547 = vmatpush1.msra.mxu0 0.0
  %1548 = vmatprep.subr.mxu0 0.0
  %1549 = vmatpush1.msra.mxu0 0.0
  %1550 = vmatprep.subr.mxu0 0.0
  %1551 = vmatpush1.msra.mxu0 0.0
  %1552 = vmatprep.subr.mxu0 0.0
  %1553 = vmatpush1.msra.mxu0 0.0
  %1554 = vmatprep.subr.mxu0 0.0
  %1555 = vmatpush1.msra.mxu0 0.0
  %1556 = vmatprep.subr.mxu0 0.0
  %1557 = vmatpush1.msra.mxu0 0.0
  %1558 = vmatprep.subr.mxu0 0.0
  %1559 = vmatpush1.msra.mxu0 0.0
  %1560 = vmatprep.subr.mxu0 0.0
  %1561 = vmatpush1.msra.mxu0 0.0
  %1562 = vmatprep.subr.mxu0 0.0
  %1563 = vmatpush1.msra.mxu0 0.0
  %1564 = vmatprep.subr.mxu0 0.0
  %1565 = vmatpush1.msra.mxu0 0.0
  %1566 = vmatprep.subr.mxu0 0.0
  %1567 = vmatpush1.msra.mxu0 0.0
  %1568 = vmatprep.subr.mxu0 0.0
  %1569 = vmatpush1.msra.mxu0 0.0
  %1570 = vmatprep.subr.mxu0 0.0
  %1571 = vmatpush1.msra.mxu0 0.0
  %1572 = vmatprep.subr.mxu0 0.0
  %1573 = vmatpush1.msra.mxu0 0.0
  %1574 = vmatprep.subr.mxu0 0.0
  %1575 = vmatpush1.msra.mxu0 0.0
  %1576 = vmatprep.subr.mxu0 0.0
  %1577 = vmatpush1.msra.mxu0 0.0
  %1578 = vmatprep.subr.mxu0 0.0
  %1579 = vmatpush1.msra.mxu0 0.0
  %1580 = vmatprep.subr.mxu0 0.0
  %1581 = vmatpush1.msra.mxu0 0.0
  %1582 = vmatprep.subr.mxu0 0.0
  %1583 = vmatpush1.msra.mxu0 0.0
  %1584 = vmatprep.subr.mxu0 0.0
  %1585 = vmatpush1.msra.mxu0 0.0
  %1586 = vmatprep.subr.mxu0 0.0
  %1587 = vmatpush1.msra.mxu0 0.0
  %1588 = vmatprep.subr.mxu0 0.0
  %1589 = vmatpush1.msra.mxu0 0.0
  %1590 = vmatprep.subr.mxu0 0.0
  %1591 = vmatpush1.msra.mxu0 0.0
  %1592 = vmatprep.mubr.f32.mxu0 0.0
  %1593 = vmatmul.mubr.f32.gmra.mrb[0].mxu0 %v1526
  %v1594 = vpop.f32.mrb[0].mxu0
  %v1595 = vadd.f32 0.0, %v1594
  %v1596 = vpop.f32.mrb[0].mxu0
  %1597 = vdwg.mxu0
  %v1598 = vadd.f32 %v40, %v1595
  %v1599 = vsel %vm580, %v1512, -inf
  %v1600 = vrot.slane %v1599, 4
  %v1601 = vmax.f32 %v1599, %v1600
  %v1602 = vrot.slane %v1601, 2
  %v1603 = vmax.f32 %v1601, %v1602
  %v1604 = vrot.slane %v1603, 1
  %v1605 = vmax.f32 %v1603, %v1604
  %vm1606 = vcmp.gt.f32.partialorder %v1605, 0.0
  %v1607 = vmul.f32 %v1605, 0.1
  %v1608 = vsel %vm1606, %v1605, %v1607
  %v1610 = vsel %vm580, %v1608, 0
  %1612 = vmatprep.subr.mxu0 0.0
  %1613 = vmatpush1.msra.mxu0 %v35
  %1614 = vmatprep.subr.mxu0 0.0
  %1615 = vmatpush1.msra.mxu0 0.0
  %1616 = vmatprep.subr.mxu0 0.0
  %1617 = vmatpush1.msra.mxu0 0.0
  %1618 = vmatprep.subr.mxu0 0.0
  %1619 = vmatpush1.msra.mxu0 0.0
  %1620 = vmatprep.subr.mxu0 0.0
  %1621 = vmatpush1.msra.mxu0 0.0
  %1622 = vmatprep.subr.mxu0 0.0
  %1623 = vmatpush1.msra.mxu0 0.0
  %1624 = vmatprep.subr.mxu0 0.0
  %1625 = vmatpush1.msra.mxu0 0.0
  %1626 = vmatprep.subr.mxu0 0.0
  %1627 = vmatpush1.msra.mxu0 0.0
  %1628 = vmatprep.subr.mxu0 0.0
  %1629 = vmatpush1.msra.mxu0 0.0
  %1630 = vmatprep.subr.mxu0 0.0
  %1631 = vmatpush1.msra.mxu0 0.0
  %1632 = vmatprep.subr.mxu0 0.0
  %1633 = vmatpush1.msra.mxu0 0.0
  %1634 = vmatprep.subr.mxu0 0.0
  %1635 = vmatpush1.msra.mxu0 0.0
  %1636 = vmatprep.subr.mxu0 0.0
  %1637 = vmatpush1.msra.mxu0 0.0
  %1638 = vmatprep.subr.mxu0 0.0
  %1639 = vmatpush1.msra.mxu0 0.0
  %1640 = vmatprep.subr.mxu0 0.0
  %1641 = vmatpush1.msra.mxu0 0.0
  %1642 = vmatprep.subr.mxu0 0.0
  %1643 = vmatpush1.msra.mxu0 0.0
  %1644 = vmatprep.subr.mxu0 0.0
  %1645 = vmatpush1.msra.mxu0 0.0
  %1646 = vmatprep.subr.mxu0 0.0
  %1647 = vmatpush1.msra.mxu0 0.0
  %1648 = vmatprep.subr.mxu0 0.0
  %1649 = vmatpush1.msra.mxu0 0.0
  %1650 = vmatprep.subr.mxu0 0.0
  %1651 = vmatpush1.msra.mxu0 0.0
  %1652 = vmatprep.subr.mxu0 0.0
  %1653 = vmatpush1.msra.mxu0 0.0
  %1654 = vmatprep.subr.mxu0 0.0
  %1655 = vmatpush1.msra.mxu0 0.0
  %1656 = vmatprep.subr.mxu0 0.0
  %1657 = vmatpush1.msra.mxu0 0.0
  %1658 = vmatprep.subr.mxu0 0.0
  %1659 = vmatpush1.msra.mxu0 0.0
  %1660 = vmatprep.subr.mxu0 0.0
  %1661 = vmatpush1.msra.mxu0 0.0
  %1662 = vmatprep.subr.mxu0 0.0
  %1663 = vmatpush1.msra.mxu0 0.0
  %1664 = vmatprep.subr.mxu0 0.0
  %1665 = vmatpush1.msra.mxu0 0.0
  %1666 = vmatprep.subr.mxu0 0.0
  %1667 = vmatpush1.msra.mxu0 0.0
  %1668 = vmatprep.subr.mxu0 0.0
  %1669 = vmatpush1.msra.mxu0 0.0
  %1670 = vmatprep.subr.mxu0 0.0
  %1671 = vmatpush1.msra.mxu0 0.0
  %1672 = vmatprep.subr.mxu0 0.0
  %1673 = vmatpush1.msra.mxu0 0.0
  %1674 = vmatprep.subr.mxu0 0.0
  %1675 = vmatpush1.msra.mxu0 0.0
  %1676 = vmatprep.mubr.f32.mxu0 0.0
  %1677 = vmatmul.mubr.f32.gmra.mrb[0].mxu0 %v1610
  %v1678 = vpop.f32.mrb[0].mxu0
  %v1679 = vadd.f32 0.0, %v1678
  %v1680 = vpop.f32.mrb[0].mxu0
  %1681 = vdwg.mxu0
  %v1682 = vadd.f32 %v1598, %v1679
  %v1683 = vsel %vm580, %v1513, -inf
  %v1684 = vrot.slane %v1683, 4
  %v1685 = vmax.f32 %v1683, %v1684
  %v1686 = vrot.slane %v1685, 2
  %v1687 = vmax.f32 %v1685, %v1686
  %v1688 = vrot.slane %v1687, 1
  %v1689 = vmax.f32 %v1687, %v1688
  %vm1690 = vcmp.gt.f32.partialorder %v1689, 0.0
  %v1691 = vmul.f32 %v1689, 0.1
  %v1692 = vsel %vm1690, %v1689, %v1691
  %v1694 = vsel %vm580, %v1692, 0
  %1696 = vmatprep.subr.mxu0 0.0
  %1697 = vmatpush1.msra.mxu0 %v37
  %1698 = vmatprep.subr.mxu0 0.0
  %1699 = vmatpush1.msra.mxu0 0.0
  %1700 = vmatprep.subr.mxu0 0.0
  %1701 = vmatpush1.msra.mxu0 0.0
  %1702 = vmatprep.subr.mxu0 0.0
  %1703 = vmatpush1.msra.mxu0 0.0
  %1704 = vmatprep.subr.mxu0 0.0
  %1705 = vmatpush1.msra.mxu0 0.0
  %1706 = vmatprep.subr.mxu0 0.0
  %1707 = vmatpush1.msra.mxu0 0.0
  %1708 = vmatprep.subr.mxu0 0.0
  %1709 = vmatpush1.msra.mxu0 0.0
  %1710 = vmatprep.subr.mxu0 0.0
  %1711 = vmatpush1.msra.mxu0 0.0
  %1712 = vmatprep.subr.mxu0 0.0
  %1713 = vmatpush1.msra.mxu0 0.0
  %1714 = vmatprep.subr.mxu0 0.0
  %1715 = vmatpush1.msra.mxu0 0.0
  %1716 = vmatprep.subr.mxu0 0.0
  %1717 = vmatpush1.msra.mxu0 0.0
  %1718 = vmatprep.subr.mxu0 0.0
  %1719 = vmatpush1.msra.mxu0 0.0
  %1720 = vmatprep.subr.mxu0 0.0
  %1721 = vmatpush1.msra.mxu0 0.0
  %1722 = vmatprep.subr.mxu0 0.0
  %1723 = vmatpush1.msra.mxu0 0.0
  %1724 = vmatprep.subr.mxu0 0.0
  %1725 = vmatpush1.msra.mxu0 0.0
  %1726 = vmatprep.subr.mxu0 0.0
  %1727 = vmatpush1.msra.mxu0 0.0
  %1728 = vmatprep.subr.mxu0 0.0
  %1729 = vmatpush1.msra.mxu0 0.0
  %1730 = vmatprep.subr.mxu0 0.0
  %1731 = vmatpush1.msra.mxu0 0.0
  %1732 = vmatprep.subr.mxu0 0.0
  %1733 = vmatpush1.msra.mxu0 0.0
  %1734 = vmatprep.subr.mxu0 0.0
  %1735 = vmatpush1.msra.mxu0 0.0
  %1736 = vmatprep.subr.mxu0 0.0
  %1737 = vmatpush1.msra.mxu0 0.0
  %1738 = vmatprep.subr.mxu0 0.0
  %1739 = vmatpush1.msra.mxu0 0.0
  %1740 = vmatprep.subr.mxu0 0.0
  %1741 = vmatpush1.msra.mxu0 0.0
  %1742 = vmatprep.subr.mxu0 0.0
  %1743 = vmatpush1.msra.mxu0 0.0
  %1744 = vmatprep.subr.mxu0 0.0
  %1745 = vmatpush1.msra.mxu0 0.0
  %1746 = vmatprep.subr.mxu0 0.0
  %1747 = vmatpush1.msra.mxu0 0.0
  %1748 = vmatprep.subr.mxu0 0.0
  %1749 = vmatpush1.msra.mxu0 0.0
  %1750 = vmatprep.subr.mxu0 0.0
  %1751 = vmatpush1.msra.mxu0 0.0
  %1752 = vmatprep.subr.mxu0 0.0
  %1753 = vmatpush1.msra.mxu0 0.0
  %1754 = vmatprep.subr.mxu0 0.0
  %1755 = vmatpush1.msra.mxu0 0.0
  %1756 = vmatprep.subr.mxu0 0.0
  %1757 = vmatpush1.msra.mxu0 0.0
  %1758 = vmatprep.subr.mxu0 0.0
  %1759 = vmatpush1.msra.mxu0 0.0
  %1760 = vmatprep.mubr.f32.mxu0 0.0
  %1761 = vmatmul.mubr.f32.gmra.mrb[0].mxu0 %v1694
  %v1762 = vpop.f32.mrb[0].mxu0
  %v1763 = vadd.f32 0.0, %v1762
  %v1764 = vpop.f32.mrb[0].mxu0
  %1765 = vdwg.mxu0
  %v1766 = vadd.f32 %v1682, %v1763
  %v1767 = vsel %vm580, %v1514, -inf
  %v1768 = vrot.slane %v1767, 4
  %v1769 = vmax.f32 %v1767, %v1768
  %v1770 = vrot.slane %v1769, 2
  %v1771 = vmax.f32 %v1769, %v1770
  %v1772 = vrot.slane %v1771, 1
  %v1773 = vmax.f32 %v1771, %v1772
  %vm1774 = vcmp.gt.f32.partialorder %v1773, 0.0
  %v1775 = vmul.f32 %v1773, 0.1
  %v1776 = vsel %vm1774, %v1773, %v1775
  %v1778 = vsel %vm580, %v1776, 0
  %1780 = vmatprep.subr.mxu0 0.0
  %1781 = vmatpush1.msra.mxu0 %v39
  %1782 = vmatprep.subr.mxu0 0.0
  %1783 = vmatpush1.msra.mxu0 0.0
  %1784 = vmatprep.subr.mxu0 0.0
  %1785 = vmatpush1.msra.mxu0 0.0
  %1786 = vmatprep.subr.mxu0 0.0
  %1787 = vmatpush1.msra.mxu0 0.0
  %1788 = vmatprep.subr.mxu0 0.0
  %1789 = vmatpush1.msra.mxu0 0.0
  %1790 = vmatprep.subr.mxu0 0.0
  %1791 = vmatpush1.msra.mxu0 0.0
  %1792 = vmatprep.subr.mxu0 0.0
  %1793 = vmatpush1.msra.mxu0 0.0
  %1794 = vmatprep.subr.mxu0 0.0
  %1795 = vmatpush1.msra.mxu0 0.0
  %1796 = vmatprep.subr.mxu0 0.0
  %1797 = vmatpush1.msra.mxu0 0.0
  %1798 = vmatprep.subr.mxu0 0.0
  %1799 = vmatpush1.msra.mxu0 0.0
  %1800 = vmatprep.subr.mxu0 0.0
  %1801 = vmatpush1.msra.mxu0 0.0
  %1802 = vmatprep.subr.mxu0 0.0
  %1803 = vmatpush1.msra.mxu0 0.0
  %1804 = vmatprep.subr.mxu0 0.0
  %1805 = vmatpush1.msra.mxu0 0.0
  %1806 = vmatprep.subr.mxu0 0.0
  %1807 = vmatpush1.msra.mxu0 0.0
  %1808 = vmatprep.subr.mxu0 0.0
  %1809 = vmatpush1.msra.mxu0 0.0
  %1810 = vmatprep.subr.mxu0 0.0
  %1811 = vmatpush1.msra.mxu0 0.0
  %1812 = vmatprep.subr.mxu0 0.0
  %1813 = vmatpush1.msra.mxu0 0.0
  %1814 = vmatprep.subr.mxu0 0.0
  %1815 = vmatpush1.msra.mxu0 0.0
  %1816 = vmatprep.subr.mxu0 0.0
  %1817 = vmatpush1.msra.mxu0 0.0
  %1818 = vmatprep.subr.mxu0 0.0
  %1819 = vmatpush1.msra.mxu0 0.0
  %1820 = vmatprep.subr.mxu0 0.0
  %1821 = vmatpush1.msra.mxu0 0.0
  %1822 = vmatprep.subr.mxu0 0.0
  %1823 = vmatpush1.msra.mxu0 0.0
  %1824 = vmatprep.subr.mxu0 0.0
  %1825 = vmatpush1.msra.mxu0 0.0
  %1826 = vmatprep.subr.mxu0 0.0
  %1827 = vmatpush1.msra.mxu0 0.0
  %1828 = vmatprep.subr.mxu0 0.0
  %1829 = vmatpush1.msra.mxu0 0.0
  %1830 = vmatprep.subr.mxu0 0.0
  %1831 = vmatpush1.msra.mxu0 0.0
  %1832 = vmatprep.subr.mxu0 0.0
  %1833 = vmatpush1.msra.mxu0 0.0
  %1834 = vmatprep.subr.mxu0 0.0
  %1835 = vmatpush1.msra.mxu0 0.0
  %1836 = vmatprep.subr.mxu0 0.0
  %1837 = vmatpush1.msra.mxu0 0.0
  %1838 = vmatprep.subr.mxu0 0.0
  %1839 = vmatpush1.msra.mxu0 0.0
  %1840 = vmatprep.subr.mxu0 0.0
  %1841 = vmatpush1.msra.mxu0 0.0
  %1842 = vmatprep.subr.mxu0 0.0
  %1843 = vmatpush1.msra.mxu0 0.0
  %1844 = vmatprep.mubr.f32.mxu0 0.0
  %1845 = vmatmul.mubr.f32.gmra.mrb[0].mxu0 %v1778
  %v1846 = vpop.f32.mrb[0].mxu0
  %v1847 = vadd.f32 0.0, %v1846
  %v1848 = vpop.f32.mrb[0].mxu0
  %1849 = vdwg.mxu0
  %v1850 = vadd.f32 %v1766, %v1847
  %vm1851 = vcmp.gt.f32.partialorder %v1850, 0.0
  %v1852 = vmul.f32 %v1850, 0.1
  %v1853 = vsel %vm1851, %v1850, %v1852
  %v1855 = vsel %vm921, %v1853, 0
  %1857 = vmatprep.subr.mxu0 0.0
  %1858 = vmatpush1.msra.mxu0 %v41
  %1859 = vmatprep.subr.mxu0 0.0
  %1860 = vmatpush1.msra.mxu0 %v42
  %1861 = vmatprep.subr.mxu0 0.0
  %1862 = vmatpush1.msra.mxu0 %v43
  %1863 = vmatprep.subr.mxu0 0.0
  %1864 = vmatpush1.msra.mxu0 %v44
  %1865 = vmatprep.subr.mxu0 0.0
  %1866 = vmatpush1.msra.mxu0 0.0
  %1867 = vmatprep.subr.mxu0 0.0
  %1868 = vmatpush1.msra.mxu0 0.0
  %1869 = vmatprep.subr.mxu0 0.0
  %1870 = vmatpush1.msra.mxu0 0.0
  %1871 = vmatprep.subr.mxu0 0.0
  %1872 = vmatpush1.msra.mxu0 0.0
  %1873 = vmatprep.subr.mxu0 0.0
  %1874 = vmatpush1.msra.mxu0 0.0
  %1875 = vmatprep.subr.mxu0 0.0
  %1876 = vmatpush1.msra.mxu0 0.0
  %1877 = vmatprep.subr.mxu0 0.0
  %1878 = vmatpush1.msra.mxu0 0.0
  %1879 = vmatprep.subr.mxu0 0.0
  %1880 = vmatpush1.msra.mxu0 0.0
  %1881 = vmatprep.subr.mxu0 0.0
  %1882 = vmatpush1.msra.mxu0 0.0
  %1883 = vmatprep.subr.mxu0 0.0
  %1884 = vmatpush1.msra.mxu0 0.0
  %1885 = vmatprep.subr.mxu0 0.0
  %1886 = vmatpush1.msra.mxu0 0.0
  %1887 = vmatprep.subr.mxu0 0.0
  %1888 = vmatpush1.msra.mxu0 0.0
  %1889 = vmatprep.subr.mxu0 0.0
  %1890 = vmatpush1.msra.mxu0 0.0
  %1891 = vmatprep.subr.mxu0 0.0
  %1892 = vmatpush1.msra.mxu0 0.0
  %1893 = vmatprep.subr.mxu0 0.0
  %1894 = vmatpush1.msra.mxu0 0.0
  %1895 = vmatprep.subr.mxu0 0.0
  %1896 = vmatpush1.msra.mxu0 0.0
  %1897 = vmatprep.subr.mxu0 0.0
  %1898 = vmatpush1.msra.mxu0 0.0
  %1899 = vmatprep.subr.mxu0 0.0
  %1900 = vmatpush1.msra.mxu0 0.0
  %1901 = vmatprep.subr.mxu0 0.0
  %1902 = vmatpush1.msra.mxu0 0.0
  %1903 = vmatprep.subr.mxu0 0.0
  %1904 = vmatpush1.msra.mxu0 0.0
  %1905 = vmatprep.subr.mxu0 0.0
  %1906 = vmatpush1.msra.mxu0 0.0
  %1907 = vmatprep.subr.mxu0 0.0
  %1908 = vmatpush1.msra.mxu0 0.0
  %1909 = vmatprep.subr.mxu0 0.0
  %1910 = vmatpush1.msra.mxu0 0.0
  %1911 = vmatprep.subr.mxu0 0.0
  %1912 = vmatpush1.msra.mxu0 0.0
  %1913 = vmatprep.subr.mxu0 0.0
  %1914 = vmatpush1.msra.mxu0 0.0
  %1915 = vmatprep.subr.mxu0 0.0
  %1916 = vmatpush1.msra.mxu0 0.0
  %1917 = vmatprep.subr.mxu0 0.0
  %1918 = vmatpush1.msra.mxu0 0.0
  %1919 = vmatprep.subr.mxu0 0.0
  %1920 = vmatpush1.msra.mxu0 0.0
  %1921 = vmatprep.mubr.f32.mxu0 0.0
  %1922 = vmatmul.mubr.f32.gmra.mrb[0].mxu0 %v1855
  %v1923 = vpop.f32.mrb[0].mxu0
  %v1924 = vadd.f32 %v920, %v1923
  %v1925 = vpop.f32.mrb[0].mxu0
  %1926 = vdwg.mxu0
  %1927 = vst.msk [vmem:[%s6 + $0x1] sm:$0x1] %vm995, %v1924
  // Predicated region
  $region26: #{snp_discriminator_forward.1} parent=0 // pred_check
    _
  $region27: #{snp_discriminator_forward.1} parent=0 // pred_check_branch
    %1929 = sbr.rel (0) target = $region29
  $region28: #{snp_discriminator_forward.1} parent=0 // pred_region
    _
  $region29: #{snp_discriminator_forward.1} parent=0 // pred_fallthru
    _
  // Predicated region
  $region30: #{snp_discriminator_forward.1} parent=0 // pred_check
    _
  $region31: #{snp_discriminator_forward.1} parent=0 // pred_check_branch
    %1931 = sbr.rel (0) target = $region33
  $region32: #{snp_discriminator_forward.1} parent=0 // pred_region
    _
  $region33: #{snp_discriminator_forward.1} parent=0 // pred_fallthru
    _

</llo_original>
